<compile_context>
chip_gen: v5e
topology: v5e:2x2
jax: 0.10.0
libtpu: 0.0.40
codegen_flags: <defaults>
</compile_context>

<pallas_src>
import jax
import jax.numpy as jnp
from jax import lax
from jax.experimental import pallas as pl
from jax.experimental.pallas import tpu as pltpu

# ---------------- configuration (mirrors the params dict) ----------------
MAX_FEATURE = 100          # vocab size
EMB_DIM = 32               # embedding dim
BIDIRECTIONAL = True
NUM_LABEL = 4
BATCH = 2
SEQ = 8
HID = EMB_DIM // 2 if BIDIRECTIONAL else EMB_DIM   # 16


# ---------------- Pallas kernel (single fused launch) ----------------
def gru_head_kernel(tok_ref,                     # SMEM (B, S) int32 token ids
                    emb_ref,                     # VMEM (V, 1, E) embedding table
                    wih_ref, bih_ref,            # VMEM (E, 6H), (1, 6H)  fused input proj
                    whh_ref, bhh_ref,            # VMEM (2H, 6H), (1, 6H) block-diag hidden proj
                    wp_ref, bp_ref,              # VMEM (2H, L), (1, L)   predictor
                    out_ref,                     # VMEM (B, L)
                    x_scr):                      # VMEM scratch (S*B, E)
    B, S = tok_ref.shape
    H2, G = whh_ref.shape                        # 2H, 6H
    H = H2 // 2

    # ---- fused embedding gather (token ids in SMEM, table rows in VMEM) ----
    for t in range(S):
        for b in range(B):
            tok = tok_ref[b, t]                  # scalar read from SMEM
            x_scr[pl.ds(t * B + b, 1), :] = emb_ref[tok]   # (1, E) row gather
    x = x_scr[...]                               # (S*B, E), time-major rows

    # ---- input projection hoisted out of the recurrence: one MXU pass ----
    # columns laid out per gate type: [r_f r_b | z_f z_b | n_f n_b]
    gxa = jnp.dot(x, wih_ref[...], preferred_element_type=jnp.float32) + bih_ref[...]

    # ---- loop-invariant values hoisted (no per-step reload / rebroadcast) ----
    whh = whh_ref[...]                                        # (2H, 6H) block-diag
    bhh = jnp.broadcast_to(bhh_ref[...], (B, G))              # (B, 6H)
    col = lax.broadcasted_iota(jnp.int32, (B, G), 1)
    fwd_mask = (col % H2) < H                                 # forward-direction columns

    # ---- bidirectional GRU recurrence, fully unrolled (S static) ----
    h = jnp.zeros((B, H2), jnp.float32)                       # [h_fwd | h_bwd]
    for t in range(S):
        gx_f = gxa[t * B:(t + 1) * B, :]                      # fwd uses x[t]
        gx_b = gxa[(S - 1 - t) * B:(S - t) * B, :]            # bwd uses x[S-1-t]
        gx = jnp.where(fwd_mask, gx_f, gx_b)                  # single vselect
        gh = jnp.dot(h, whh, preferred_element_type=jnp.float32) + bhh
        r = jax.nn.sigmoid(gx[:, 0:H2] + gh[:, 0:H2])
        z = jax.nn.sigmoid(gx[:, H2:2 * H2] + gh[:, H2:2 * H2])
        n = jnp.tanh(gx[:, 2 * H2:3 * H2] + r * gh[:, 2 * H2:3 * H2])
        h = (1.0 - z) * n + z * h                             # both directions at once

    # ---- predictor head: cat(h_fwd, h_bwd) is already the layout of h ----
    out_ref[...] = (jnp.dot(h, wp_ref[...], preferred_element_type=jnp.float32)
                    + bp_ref[...])


# ---------------- one-time parameter packing (outside the hot path) ----------------
def pack_params(emb_table, params):
    (wih_f, whh_f, bih_f, bhh_f,
     wih_b, whh_b, bih_b, bhh_b, wp, bp) = params
    H = HID
    G = 6 * H

    def interleave_cols(mf, mb):
        # (3H, K) torch layout -> (K, 6H) with per-gate fwd/bwd interleaving
        parts = []
        for g in range(3):
            parts.append(mf[g * H:(g + 1) * H, :].T)
            parts.append(mb[g * H:(g + 1) * H, :].T)
        return jnp.concatenate(parts, axis=1).astype(jnp.float32)

    def interleave_bias(bf, bb):
        parts = []
        for g in range(3):
            parts.append(bf[g * H:(g + 1) * H])
            parts.append(bb[g * H:(g + 1) * H])
        return jnp.concatenate(parts)[None, :].astype(jnp.float32)

    wih_L = interleave_cols(wih_f, wih_b)                     # (E, 6H)
    bih_L = interleave_bias(bih_f, bih_b)                     # (1, 6H)

    whh_L = jnp.zeros((2 * H, G), jnp.float32)                # block-diagonal
    for g in range(3):
        whh_L = whh_L.at[0:H, g * 2 * H:g * 2 * H + H].set(
            whh_f[g * H:(g + 1) * H, :].T)
        whh_L = whh_L.at[H:2 * H, g * 2 * H + H:(g + 1) * 2 * H].set(
            whh_b[g * H:(g + 1) * H, :].T)
    bhh_L = interleave_bias(bhh_f, bhh_b)                     # (1, 6H)

    wp_L = wp.T.astype(jnp.float32)                           # (2H, L)
    bp_L = bp[None, :].astype(jnp.float32)                    # (1, L)

    emb3 = emb_table.astype(jnp.float32).reshape(MAX_FEATURE, 1, EMB_DIM)
    return (emb3, wih_L, bih_L, whh_L, bhh_L, wp_L, bp_L)


# ---------------- wrapper ----------------
@jax.jit
def rnn_forward(tokens, packed):
    emb3, wih_L, bih_L, whh_L, bhh_L, wp_L, bp_L = packed
    B, S = tokens.shape
    E = emb3.shape[-1]

    smem = pl.BlockSpec(memory_space=pltpu.MemorySpace.SMEM)
    vmem = pl.BlockSpec(memory_space=pltpu.MemorySpace.VMEM)
    return pl.pallas_call(
        gru_head_kernel,
        out_shape=jax.ShapeDtypeStruct((B, NUM_LABEL), jnp.float32),
        in_specs=[smem] + [vmem] * 7,
        out_specs=vmem,
        scratch_shapes=[pltpu.VMEM((S * B, E), jnp.float32)],
    )(tokens, emb3, wih_L, bih_L, whh_L, bhh_L, wp_L, bp_L)


# ---------------- pure-JAX reference (sanity check) ----------------
def reference_forward(tokens, emb_table, params):
    (wih_f, whh_f, bih_f, bhh_f,
     wih_b, whh_b, bih_b, bhh_b, wp, bp) = params
    x = jnp.take(emb_table, tokens, axis=0)                   # (B, S, E)

    def run(xseq, wih, whh, bih, bhh):
        h = jnp.zeros((xseq.shape[0], HID), jnp.float32)
        for t in range(xseq.shape[1]):
            xt = xseq[:, t, :]
            gx = xt @ wih.T + bih
            gh = h @ whh.T + bhh
            r = jax.nn.sigmoid(gx[:, :HID] + gh[:, :HID])
            z = jax.nn.sigmoid(gx[:, HID:2 * HID] + gh[:, HID:2 * HID])
            n = jnp.tanh(gx[:, 2 * HID:] + r * gh[:, 2 * HID:])
            h = (1.0 - z) * n + z * h
        return h

    h_f = run(x, wih_f, whh_f, bih_f, bhh_f)
    h_b = run(x[:, ::-1, :], wih_b, whh_b, bih_b, bhh_b)
    doc_general = jnp.concatenate([h_f, h_b], axis=-1)
    return doc_general @ wp.T + bp


# ---------------- deterministic parameter init ----------------
def init_params(key):
    ks = jax.random.split(key, 12)
    emb = jax.random.uniform(ks[0], (MAX_FEATURE, EMB_DIM), jnp.float32, -0.5, 0.5)

    k_gru = 1.0 / (HID ** 0.5)

    def u(kk, shape, bound):
        return jax.random.uniform(kk, shape, jnp.float32, -bound, bound)

    wih_f = u(ks[1], (3 * HID, EMB_DIM), k_gru)
    whh_f = u(ks[2], (3 * HID, HID), k_gru)
    bih_f = u(ks[3], (3 * HID,), k_gru)
    bhh_f = u(ks[4], (3 * HID,), k_gru)
    wih_b = u(ks[5], (3 * HID, EMB_DIM), k_gru)
    whh_b = u(ks[6], (3 * HID, HID), k_gru)
    bih_b = u(ks[7], (3 * HID,), k_gru)
    bhh_b = u(ks[8], (3 * HID,), k_gru)

    k_lin = 1.0 / (EMB_DIM ** 0.5)
    wp = u(ks[9], (NUM_LABEL, EMB_DIM), k_lin)
    bp = u(ks[10], (NUM_LABEL,), k_lin)

    tokens = jax.random.randint(ks[11], (BATCH, SEQ), 0, MAX_FEATURE, dtype=jnp.int32)
    params = (wih_f, whh_f, bih_f, bhh_f, wih_b, whh_b, bih_b, bhh_b, wp, bp)
    return tokens, emb, params


if __name__ == "__main__":
    tokens, emb_table, params = init_params(jax.random.PRNGKey(0))
    packed = pack_params(emb_table, params)       # one-time weight fusion/transpose

    preds = rnn_forward(tokens, packed)
    preds = jax.block_until_ready(preds)

    ref = reference_forward(tokens, emb_table, params)
    assert preds.shape == (BATCH, NUM_LABEL)
    assert jnp.allclose(preds, ref, atol=5e-2, rtol=5e-2)

    print("KERNEL_OK")
</pallas_src>

<mosaic_0001>
module attributes {stable_mosaic.version = 11 : i64} {
  func.func @gru_head_kernel(%arg0: memref<2x8xi32, #tpu.memory_space<smem>>, %arg1: memref<100x1x32xf32, #tpu.memory_space<vmem>>, %arg2: memref<32x96xf32, #tpu.memory_space<vmem>>, %arg3: memref<1x96xf32, #tpu.memory_space<vmem>>, %arg4: memref<32x96xf32, #tpu.memory_space<vmem>>, %arg5: memref<1x96xf32, #tpu.memory_space<vmem>>, %arg6: memref<32x4xf32, #tpu.memory_space<vmem>>, %arg7: memref<1x4xf32, #tpu.memory_space<vmem>>, %arg8: memref<2x4xf32, #tpu.memory_space<vmem>>, %arg9: memref<16x32xf32, #tpu.memory_space<vmem>>) attributes {dimension_semantics = [], scalar_prefetch = 0 : i64, scratch_operands = 1 : i64, tpu.core_type = #tpu.core_type<tc>} {
    %c0 = arith.constant 0 : index
    %c0_0 = arith.constant 0 : index
    %0 = memref.load %arg0[%c0, %c0_0] : memref<2x8xi32, #tpu.memory_space<smem>>
    %1 = arith.index_cast %0 : i32 to index
    %c0_1 = arith.constant 0 : index
    %c0_2 = arith.constant 0 : index
    %2 = vector.load %arg1[%1, %c0_1, %c0_2] : memref<100x1x32xf32, #tpu.memory_space<vmem>>, vector<1x1x32xf32>
    %3 = vector.shape_cast %2 : vector<1x1x32xf32> to vector<1x32xf32>
    %c0_3 = arith.constant 0 : index
    %c0_4 = arith.constant 0 : index
    %4 = vector.load %arg9[%c0_3, %c0_4] : memref<16x32xf32, #tpu.memory_space<vmem>>, vector<1x32xf32>
    tpu.vector_store %arg9[%c0_3, %c0_4], %3 {strides = array<i32>} : memref<16x32xf32, #tpu.memory_space<vmem>>, vector<1x32xf32>,
    %c1 = arith.constant 1 : index
    %c0_5 = arith.constant 0 : index
    %5 = memref.load %arg0[%c1, %c0_5] : memref<2x8xi32, #tpu.memory_space<smem>>
    %6 = arith.index_cast %5 : i32 to index
    %c0_6 = arith.constant 0 : index
    %c0_7 = arith.constant 0 : index
    %7 = vector.load %arg1[%6, %c0_6, %c0_7] : memref<100x1x32xf32, #tpu.memory_space<vmem>>, vector<1x1x32xf32>
    %8 = vector.shape_cast %7 : vector<1x1x32xf32> to vector<1x32xf32>
    %c1_8 = arith.constant 1 : index
    %c0_9 = arith.constant 0 : index
    %9 = vector.load %arg9[%c1_8, %c0_9] : memref<16x32xf32, #tpu.memory_space<vmem>>, vector<1x32xf32>
    tpu.vector_store %arg9[%c1_8, %c0_9], %8 {strides = array<i32>} : memref<16x32xf32, #tpu.memory_space<vmem>>, vector<1x32xf32>,
    %c0_10 = arith.constant 0 : index
    %c1_11 = arith.constant 1 : index
    %10 = memref.load %arg0[%c0_10, %c1_11] : memref<2x8xi32, #tpu.memory_space<smem>>
    %11 = arith.index_cast %10 : i32 to index
    %c0_12 = arith.constant 0 : index
    %c0_13 = arith.constant 0 : index
    %12 = vector.load %arg1[%11, %c0_12, %c0_13] : memref<100x1x32xf32, #tpu.memory_space<vmem>>, vector<1x1x32xf32>
    %13 = vector.shape_cast %12 : vector<1x1x32xf32> to vector<1x32xf32>
    %c2 = arith.constant 2 : index
    %c0_14 = arith.constant 0 : index
    %14 = vector.load %arg9[%c2, %c0_14] : memref<16x32xf32, #tpu.memory_space<vmem>>, vector<1x32xf32>
    tpu.vector_store %arg9[%c2, %c0_14], %13 {strides = array<i32>} : memref<16x32xf32, #tpu.memory_space<vmem>>, vector<1x32xf32>,
    %c1_15 = arith.constant 1 : index
    %c1_16 = arith.constant 1 : index
    %15 = memref.load %arg0[%c1_15, %c1_16] : memref<2x8xi32, #tpu.memory_space<smem>>
    %16 = arith.index_cast %15 : i32 to index
    %c0_17 = arith.constant 0 : index
    %c0_18 = arith.constant 0 : index
    %17 = vector.load %arg1[%16, %c0_17, %c0_18] : memref<100x1x32xf32, #tpu.memory_space<vmem>>, vector<1x1x32xf32>
    %18 = vector.shape_cast %17 : vector<1x1x32xf32> to vector<1x32xf32>
    %c3 = arith.constant 3 : index
    %c0_19 = arith.constant 0 : index
    %19 = vector.load %arg9[%c3, %c0_19] : memref<16x32xf32, #tpu.memory_space<vmem>>, vector<1x32xf32>
    tpu.vector_store %arg9[%c3, %c0_19], %18 {strides = array<i32>} : memref<16x32xf32, #tpu.memory_space<vmem>>, vector<1x32xf32>,
    %c0_20 = arith.constant 0 : index
    %c2_21 = arith.constant 2 : index
    %20 = memref.load %arg0[%c0_20, %c2_21] : memref<2x8xi32, #tpu.memory_space<smem>>
    %21 = arith.index_cast %20 : i32 to index
    %c0_22 = arith.constant 0 : index
    %c0_23 = arith.constant 0 : index
    %22 = vector.load %arg1[%21, %c0_22, %c0_23] : memref<100x1x32xf32, #tpu.memory_space<vmem>>, vector<1x1x32xf32>
    %23 = vector.shape_cast %22 : vector<1x1x32xf32> to vector<1x32xf32>
    %c4 = arith.constant 4 : index
    %c0_24 = arith.constant 0 : index
    %24 = vector.load %arg9[%c4, %c0_24] : memref<16x32xf32, #tpu.memory_space<vmem>>, vector<1x32xf32>
    tpu.vector_store %arg9[%c4, %c0_24], %23 {strides = array<i32>} : memref<16x32xf32, #tpu.memory_space<vmem>>, vector<1x32xf32>,
    %c1_25 = arith.constant 1 : index
    %c2_26 = arith.constant 2 : index
    %25 = memref.load %arg0[%c1_25, %c2_26] : memref<2x8xi32, #tpu.memory_space<smem>>
    %26 = arith.index_cast %25 : i32 to index
    %c0_27 = arith.constant 0 : index
    %c0_28 = arith.constant 0 : index
    %27 = vector.load %arg1[%26, %c0_27, %c0_28] : memref<100x1x32xf32, #tpu.memory_space<vmem>>, vector<1x1x32xf32>
    %28 = vector.shape_cast %27 : vector<1x1x32xf32> to vector<1x32xf32>
    %c5 = arith.constant 5 : index
    %c0_29 = arith.constant 0 : index
    %29 = vector.load %arg9[%c5, %c0_29] : memref<16x32xf32, #tpu.memory_space<vmem>>, vector<1x32xf32>
    tpu.vector_store %arg9[%c5, %c0_29], %28 {strides = array<i32>} : memref<16x32xf32, #tpu.memory_space<vmem>>, vector<1x32xf32>,
    %c0_30 = arith.constant 0 : index
    %c3_31 = arith.constant 3 : index
    %30 = memref.load %arg0[%c0_30, %c3_31] : memref<2x8xi32, #tpu.memory_space<smem>>
    %31 = arith.index_cast %30 : i32 to index
    %c0_32 = arith.constant 0 : index
    %c0_33 = arith.constant 0 : index
    %32 = vector.load %arg1[%31, %c0_32, %c0_33] : memref<100x1x32xf32, #tpu.memory_space<vmem>>, vector<1x1x32xf32>
    %33 = vector.shape_cast %32 : vector<1x1x32xf32> to vector<1x32xf32>
    %c6 = arith.constant 6 : index
    %c0_34 = arith.constant 0 : index
    %34 = vector.load %arg9[%c6, %c0_34] : memref<16x32xf32, #tpu.memory_space<vmem>>, vector<1x32xf32>
    tpu.vector_store %arg9[%c6, %c0_34], %33 {strides = array<i32>} : memref<16x32xf32, #tpu.memory_space<vmem>>, vector<1x32xf32>,
    %c1_35 = arith.constant 1 : index
    %c3_36 = arith.constant 3 : index
    %35 = memref.load %arg0[%c1_35, %c3_36] : memref<2x8xi32, #tpu.memory_space<smem>>
    %36 = arith.index_cast %35 : i32 to index
    %c0_37 = arith.constant 0 : index
    %c0_38 = arith.constant 0 : index
    %37 = vector.load %arg1[%36, %c0_37, %c0_38] : memref<100x1x32xf32, #tpu.memory_space<vmem>>, vector<1x1x32xf32>
    %38 = vector.shape_cast %37 : vector<1x1x32xf32> to vector<1x32xf32>
    %c7 = arith.constant 7 : index
    %c0_39 = arith.constant 0 : index
    %39 = vector.load %arg9[%c7, %c0_39] : memref<16x32xf32, #tpu.memory_space<vmem>>, vector<1x32xf32>
    tpu.vector_store %arg9[%c7, %c0_39], %38 {strides = array<i32>} : memref<16x32xf32, #tpu.memory_space<vmem>>, vector<1x32xf32>,
    %c0_40 = arith.constant 0 : index
    %c4_41 = arith.constant 4 : index
    %40 = memref.load %arg0[%c0_40, %c4_41] : memref<2x8xi32, #tpu.memory_space<smem>>
    %41 = arith.index_cast %40 : i32 to index
    %c0_42 = arith.constant 0 : index
    %c0_43 = arith.constant 0 : index
    %42 = vector.load %arg1[%41, %c0_42, %c0_43] : memref<100x1x32xf32, #tpu.memory_space<vmem>>, vector<1x1x32xf32>
    %43 = vector.shape_cast %42 : vector<1x1x32xf32> to vector<1x32xf32>
    %c8 = arith.constant 8 : index
    %c0_44 = arith.constant 0 : index
    %44 = vector.load %arg9[%c8, %c0_44] : memref<16x32xf32, #tpu.memory_space<vmem>>, vector<1x32xf32>
    tpu.vector_store %arg9[%c8, %c0_44], %43 {strides = array<i32>} : memref<16x32xf32, #tpu.memory_space<vmem>>, vector<1x32xf32>,
    %c1_45 = arith.constant 1 : index
    %c4_46 = arith.constant 4 : index
    %45 = memref.load %arg0[%c1_45, %c4_46] : memref<2x8xi32, #tpu.memory_space<smem>>
    %46 = arith.index_cast %45 : i32 to index
    %c0_47 = arith.constant 0 : index
    %c0_48 = arith.constant 0 : index
    %47 = vector.load %arg1[%46, %c0_47, %c0_48] : memref<100x1x32xf32, #tpu.memory_space<vmem>>, vector<1x1x32xf32>
    %48 = vector.shape_cast %47 : vector<1x1x32xf32> to vector<1x32xf32>
    %c9 = arith.constant 9 : index
    %c0_49 = arith.constant 0 : index
    %49 = vector.load %arg9[%c9, %c0_49] : memref<16x32xf32, #tpu.memory_space<vmem>>, vector<1x32xf32>
    tpu.vector_store %arg9[%c9, %c0_49], %48 {strides = array<i32>} : memref<16x32xf32, #tpu.memory_space<vmem>>, vector<1x32xf32>,
    %c0_50 = arith.constant 0 : index
    %c5_51 = arith.constant 5 : index
    %50 = memref.load %arg0[%c0_50, %c5_51] : memref<2x8xi32, #tpu.memory_space<smem>>
    %51 = arith.index_cast %50 : i32 to index
    %c0_52 = arith.constant 0 : index
    %c0_53 = arith.constant 0 : index
    %52 = vector.load %arg1[%51, %c0_52, %c0_53] : memref<100x1x32xf32, #tpu.memory_space<vmem>>, vector<1x1x32xf32>
    %53 = vector.shape_cast %52 : vector<1x1x32xf32> to vector<1x32xf32>
    %c10 = arith.constant 10 : index
    %c0_54 = arith.constant 0 : index
    %54 = vector.load %arg9[%c10, %c0_54] : memref<16x32xf32, #tpu.memory_space<vmem>>, vector<1x32xf32>
    tpu.vector_store %arg9[%c10, %c0_54], %53 {strides = array<i32>} : memref<16x32xf32, #tpu.memory_space<vmem>>, vector<1x32xf32>,
    %c1_55 = arith.constant 1 : index
    %c5_56 = arith.constant 5 : index
    %55 = memref.load %arg0[%c1_55, %c5_56] : memref<2x8xi32, #tpu.memory_space<smem>>
    %56 = arith.index_cast %55 : i32 to index
    %c0_57 = arith.constant 0 : index
    %c0_58 = arith.constant 0 : index
    %57 = vector.load %arg1[%56, %c0_57, %c0_58] : memref<100x1x32xf32, #tpu.memory_space<vmem>>, vector<1x1x32xf32>
    %58 = vector.shape_cast %57 : vector<1x1x32xf32> to vector<1x32xf32>
    %c11 = arith.constant 11 : index
    %c0_59 = arith.constant 0 : index
    %59 = vector.load %arg9[%c11, %c0_59] : memref<16x32xf32, #tpu.memory_space<vmem>>, vector<1x32xf32>
    tpu.vector_store %arg9[%c11, %c0_59], %58 {strides = array<i32>} : memref<16x32xf32, #tpu.memory_space<vmem>>, vector<1x32xf32>,
    %c0_60 = arith.constant 0 : index
    %c6_61 = arith.constant 6 : index
    %60 = memref.load %arg0[%c0_60, %c6_61] : memref<2x8xi32, #tpu.memory_space<smem>>
    %61 = arith.index_cast %60 : i32 to index
    %c0_62 = arith.constant 0 : index
    %c0_63 = arith.constant 0 : index
    %62 = vector.load %arg1[%61, %c0_62, %c0_63] : memref<100x1x32xf32, #tpu.memory_space<vmem>>, vector<1x1x32xf32>
    %63 = vector.shape_cast %62 : vector<1x1x32xf32> to vector<1x32xf32>
    %c12 = arith.constant 12 : index
    %c0_64 = arith.constant 0 : index
    %64 = vector.load %arg9[%c12, %c0_64] : memref<16x32xf32, #tpu.memory_space<vmem>>, vector<1x32xf32>
    tpu.vector_store %arg9[%c12, %c0_64], %63 {strides = array<i32>} : memref<16x32xf32, #tpu.memory_space<vmem>>, vector<1x32xf32>,
    %c1_65 = arith.constant 1 : index
    %c6_66 = arith.constant 6 : index
    %65 = memref.load %arg0[%c1_65, %c6_66] : memref<2x8xi32, #tpu.memory_space<smem>>
    %66 = arith.index_cast %65 : i32 to index
    %c0_67 = arith.constant 0 : index
    %c0_68 = arith.constant 0 : index
    %67 = vector.load %arg1[%66, %c0_67, %c0_68] : memref<100x1x32xf32, #tpu.memory_space<vmem>>, vector<1x1x32xf32>
    %68 = vector.shape_cast %67 : vector<1x1x32xf32> to vector<1x32xf32>
    %c13 = arith.constant 13 : index
    %c0_69 = arith.constant 0 : index
    %69 = vector.load %arg9[%c13, %c0_69] : memref<16x32xf32, #tpu.memory_space<vmem>>, vector<1x32xf32>
    tpu.vector_store %arg9[%c13, %c0_69], %68 {strides = array<i32>} : memref<16x32xf32, #tpu.memory_space<vmem>>, vector<1x32xf32>,
    %c0_70 = arith.constant 0 : index
    %c7_71 = arith.constant 7 : index
    %70 = memref.load %arg0[%c0_70, %c7_71] : memref<2x8xi32, #tpu.memory_space<smem>>
    %71 = arith.index_cast %70 : i32 to index
    %c0_72 = arith.constant 0 : index
    %c0_73 = arith.constant 0 : index
    %72 = vector.load %arg1[%71, %c0_72, %c0_73] : memref<100x1x32xf32, #tpu.memory_space<vmem>>, vector<1x1x32xf32>
    %73 = vector.shape_cast %72 : vector<1x1x32xf32> to vector<1x32xf32>
    %c14 = arith.constant 14 : index
    %c0_74 = arith.constant 0 : index
    %74 = vector.load %arg9[%c14, %c0_74] : memref<16x32xf32, #tpu.memory_space<vmem>>, vector<1x32xf32>
    tpu.vector_store %arg9[%c14, %c0_74], %73 {strides = array<i32>} : memref<16x32xf32, #tpu.memory_space<vmem>>, vector<1x32xf32>,
    %c1_75 = arith.constant 1 : index
    %c7_76 = arith.constant 7 : index
    %75 = memref.load %arg0[%c1_75, %c7_76] : memref<2x8xi32, #tpu.memory_space<smem>>
    %76 = arith.index_cast %75 : i32 to index
    %c0_77 = arith.constant 0 : index
    %c0_78 = arith.constant 0 : index
    %77 = vector.load %arg1[%76, %c0_77, %c0_78] : memref<100x1x32xf32, #tpu.memory_space<vmem>>, vector<1x1x32xf32>
    %78 = vector.shape_cast %77 : vector<1x1x32xf32> to vector<1x32xf32>
    %c15 = arith.constant 15 : index
    %c0_79 = arith.constant 0 : index
    %79 = vector.load %arg9[%c15, %c0_79] : memref<16x32xf32, #tpu.memory_space<vmem>>, vector<1x32xf32>
    tpu.vector_store %arg9[%c15, %c0_79], %78 {strides = array<i32>} : memref<16x32xf32, #tpu.memory_space<vmem>>, vector<1x32xf32>,
    %c0_80 = arith.constant 0 : index
    %c0_81 = arith.constant 0 : index
    %80 = vector.load %arg9[%c0_80, %c0_81] : memref<16x32xf32, #tpu.memory_space<vmem>>, vector<16x32xf32>
    %c0_82 = arith.constant 0 : index
    %c0_83 = arith.constant 0 : index
    %81 = vector.load %arg2[%c0_82, %c0_83] : memref<32x96xf32, #tpu.memory_space<vmem>>, vector<32x96xf32>
    %cst = arith.constant dense<0.000000e+00> : vector<16x96xf32>
    %82 = tpu.matmul %80, %81, %cst {dimension_numbers = #tpu.dot_dimension_numbers<[1], [0], [0], [1], [0, 0, 1, 1], [], []>} : vector<16x32xf32>, vector<32x96xf32>, vector<16x96xf32> -> vector<16x96xf32>
    %c0_84 = arith.constant 0 : index
    %c0_85 = arith.constant 0 : index
    %83 = vector.load %arg3[%c0_84, %c0_85] : memref<1x96xf32, #tpu.memory_space<vmem>>, vector<1x96xf32>
    %84 = vector.broadcast %83 : vector<1x96xf32> to vector<16x96xf32>
    %85 = arith.addf %82, %84 : vector<16x96xf32>
    %c0_86 = arith.constant 0 : index
    %c0_87 = arith.constant 0 : index
    %86 = vector.load %arg4[%c0_86, %c0_87] : memref<32x96xf32, #tpu.memory_space<vmem>>, vector<32x96xf32>
    %c0_88 = arith.constant 0 : index
    %c0_89 = arith.constant 0 : index
    %87 = vector.load %arg5[%c0_88, %c0_89] : memref<1x96xf32, #tpu.memory_space<vmem>>, vector<1x96xf32>
    %88 = vector.shape_cast %87 : vector<1x96xf32> to vector<1x96xf32>
    %89 = vector.broadcast %88 : vector<1x96xf32> to vector<2x96xf32>
    %90 = tpu.iota {dimensions = array<i32: 1>} : vector<2x96xi32>
    %c32_i32 = arith.constant 32 : i32
    %c0_i32 = arith.constant 0 : i32
    %91 = arith.cmpi eq, %c32_i32, %c0_i32 : i32
    %c1_i32 = arith.constant 1 : i32
    %92 = arith.select %91, %c1_i32, %c32_i32 : i32
    %93 = vector.broadcast %92 : i32 to vector<2x96xi32>
    %94 = arith.remsi %90, %93 : vector<2x96xi32>
    %c0_i32_90 = arith.constant 0 : i32
    %95 = vector.broadcast %c0_i32_90 : i32 to vector<2x96xi32>
    %96 = arith.cmpi ne, %94, %95 : vector<2x96xi32>
    %c0_i32_91 = arith.constant 0 : i32
    %97 = vector.broadcast %c0_i32_91 : i32 to vector<2x96xi32>
    %98 = arith.cmpi slt, %94, %97 : vector<2x96xi32>
    %c0_i32_92 = arith.constant 0 : i32
    %99 = arith.cmpi slt, %92, %c0_i32_92 : i32
    %100 = vector.broadcast %99 : i1 to vector<2x96xi1>
    %101 = vector.broadcast %100 : vector<2x96xi1> to vector<2x96xi1>
    %102 = arith.xori %98, %101 : vector<2x96xi1>
    %103 = arith.andi %102, %96 : vector<2x96xi1>
    %104 = vector.broadcast %92 : i32 to vector<2x96xi32>
    %105 = arith.addi %94, %104 : vector<2x96xi32>
    %106 = arith.select %103, %105, %94 : vector<2x96xi1>, vector<2x96xi32>
    %c16_i32 = arith.constant 16 : i32
    %107 = vector.broadcast %c16_i32 : i32 to vector<2x96xi32>
    %108 = arith.cmpi slt, %106, %107 : vector<2x96xi32>
    %cst_93 = arith.constant 0.000000e+00 : f32
    %109 = vector.broadcast %cst_93 : f32 to vector<2x32xf32>
    %110 = vector.extract_strided_slice %85 {offsets = [0, 0], sizes = [2, 96], strides = [1, 1]} : vector<16x96xf32> to vector<2x96xf32>
    %111 = vector.extract_strided_slice %85 {offsets = [14, 0], sizes = [2, 96], strides = [1, 1]} : vector<16x96xf32> to vector<2x96xf32>
    %112 = arith.select %108, %110, %111 : vector<2x96xi1>, vector<2x96xf32>
    %cst_94 = arith.constant dense<0.000000e+00> : vector<2x96xf32>
    %113 = tpu.matmul %109, %86, %cst_94 {dimension_numbers = #tpu.dot_dimension_numbers<[1], [0], [0], [1], [0, 0, 1, 1], [], []>} : vector<2x32xf32>, vector<32x96xf32>, vector<2x96xf32> -> vector<2x96xf32>
    %114 = arith.addf %113, %89 : vector<2x96xf32>
    %115 = vector.extract_strided_slice %112 {offsets = [0, 0], sizes = [2, 32], strides = [1, 1]} : vector<2x96xf32> to vector<2x32xf32>
    %116 = vector.extract_strided_slice %114 {offsets = [0, 0], sizes = [2, 32], strides = [1, 1]} : vector<2x96xf32> to vector<2x32xf32>
    %117 = arith.addf %115, %116 : vector<2x32xf32>
    %118 = arith.negf %117 : vector<2x32xf32>
    %119 = math.exp %118 : vector<2x32xf32>
    %cst_95 = arith.constant 1.000000e+00 : f32
    %120 = vector.broadcast %cst_95 : f32 to vector<2x32xf32>
    %121 = arith.addf %120, %119 : vector<2x32xf32>
    %122 = arith.divf %120, %121 : vector<2x32xf32>
    %123 = vector.extract_strided_slice %112 {offsets = [0, 32], sizes = [2, 32], strides = [1, 1]} : vector<2x96xf32> to vector<2x32xf32>
    %124 = vector.extract_strided_slice %114 {offsets = [0, 32], sizes = [2, 32], strides = [1, 1]} : vector<2x96xf32> to vector<2x32xf32>
    %125 = arith.addf %123, %124 : vector<2x32xf32>
    %126 = arith.negf %125 : vector<2x32xf32>
    %127 = math.exp %126 : vector<2x32xf32>
    %cst_96 = arith.constant 1.000000e+00 : f32
    %128 = vector.broadcast %cst_96 : f32 to vector<2x32xf32>
    %129 = arith.addf %128, %127 : vector<2x32xf32>
    %130 = arith.divf %128, %129 : vector<2x32xf32>
    %131 = vector.extract_strided_slice %112 {offsets = [0, 64], sizes = [2, 32], strides = [1, 1]} : vector<2x96xf32> to vector<2x32xf32>
    %132 = vector.extract_strided_slice %114 {offsets = [0, 64], sizes = [2, 32], strides = [1, 1]} : vector<2x96xf32> to vector<2x32xf32>
    %133 = arith.mulf %122, %132 : vector<2x32xf32>
    %134 = arith.addf %131, %133 : vector<2x32xf32>
    %135 = math.tanh %134 : vector<2x32xf32>
    %cst_97 = arith.constant 1.000000e+00 : f32
    %136 = vector.broadcast %cst_97 : f32 to vector<2x32xf32>
    %137 = arith.subf %136, %130 : vector<2x32xf32>
    %138 = arith.mulf %137, %135 : vector<2x32xf32>
    %139 = arith.mulf %130, %109 : vector<2x32xf32>
    %140 = arith.addf %138, %139 : vector<2x32xf32>
    %141 = vector.extract_strided_slice %85 {offsets = [2, 0], sizes = [2, 96], strides = [1, 1]} : vector<16x96xf32> to vector<2x96xf32>
    %142 = vector.extract_strided_slice %85 {offsets = [12, 0], sizes = [2, 96], strides = [1, 1]} : vector<16x96xf32> to vector<2x96xf32>
    %143 = arith.select %108, %141, %142 : vector<2x96xi1>, vector<2x96xf32>
    %cst_98 = arith.constant dense<0.000000e+00> : vector<2x96xf32>
    %144 = tpu.matmul %140, %86, %cst_98 {dimension_numbers = #tpu.dot_dimension_numbers<[1], [0], [0], [1], [0, 0, 1, 1], [], []>} : vector<2x32xf32>, vector<32x96xf32>, vector<2x96xf32> -> vector<2x96xf32>
    %145 = arith.addf %144, %89 : vector<2x96xf32>
    %146 = vector.extract_strided_slice %143 {offsets = [0, 0], sizes = [2, 32], strides = [1, 1]} : vector<2x96xf32> to vector<2x32xf32>
    %147 = vector.extract_strided_slice %145 {offsets = [0, 0], sizes = [2, 32], strides = [1, 1]} : vector<2x96xf32> to vector<2x32xf32>
    %148 = arith.addf %146, %147 : vector<2x32xf32>
    %149 = arith.negf %148 : vector<2x32xf32>
    %150 = math.exp %149 : vector<2x32xf32>
    %cst_99 = arith.constant 1.000000e+00 : f32
    %151 = vector.broadcast %cst_99 : f32 to vector<2x32xf32>
    %152 = arith.addf %151, %150 : vector<2x32xf32>
    %153 = arith.divf %151, %152 : vector<2x32xf32>
    %154 = vector.extract_strided_slice %143 {offsets = [0, 32], sizes = [2, 32], strides = [1, 1]} : vector<2x96xf32> to vector<2x32xf32>
    %155 = vector.extract_strided_slice %145 {offsets = [0, 32], sizes = [2, 32], strides = [1, 1]} : vector<2x96xf32> to vector<2x32xf32>
    %156 = arith.addf %154, %155 : vector<2x32xf32>
    %157 = arith.negf %156 : vector<2x32xf32>
    %158 = math.exp %157 : vector<2x32xf32>
    %cst_100 = arith.constant 1.000000e+00 : f32
    %159 = vector.broadcast %cst_100 : f32 to vector<2x32xf32>
    %160 = arith.addf %159, %158 : vector<2x32xf32>
    %161 = arith.divf %159, %160 : vector<2x32xf32>
    %162 = vector.extract_strided_slice %143 {offsets = [0, 64], sizes = [2, 32], strides = [1, 1]} : vector<2x96xf32> to vector<2x32xf32>
    %163 = vector.extract_strided_slice %145 {offsets = [0, 64], sizes = [2, 32], strides = [1, 1]} : vector<2x96xf32> to vector<2x32xf32>
    %164 = arith.mulf %153, %163 : vector<2x32xf32>
    %165 = arith.addf %162, %164 : vector<2x32xf32>
    %166 = math.tanh %165 : vector<2x32xf32>
    %cst_101 = arith.constant 1.000000e+00 : f32
    %167 = vector.broadcast %cst_101 : f32 to vector<2x32xf32>
    %168 = arith.subf %167, %161 : vector<2x32xf32>
    %169 = arith.mulf %168, %166 : vector<2x32xf32>
    %170 = arith.mulf %161, %140 : vector<2x32xf32>
    %171 = arith.addf %169, %170 : vector<2x32xf32>
    %172 = vector.extract_strided_slice %85 {offsets = [4, 0], sizes = [2, 96], strides = [1, 1]} : vector<16x96xf32> to vector<2x96xf32>
    %173 = vector.extract_strided_slice %85 {offsets = [10, 0], sizes = [2, 96], strides = [1, 1]} : vector<16x96xf32> to vector<2x96xf32>
    %174 = arith.select %108, %172, %173 : vector<2x96xi1>, vector<2x96xf32>
    %cst_102 = arith.constant dense<0.000000e+00> : vector<2x96xf32>
    %175 = tpu.matmul %171, %86, %cst_102 {dimension_numbers = #tpu.dot_dimension_numbers<[1], [0], [0], [1], [0, 0, 1, 1], [], []>} : vector<2x32xf32>, vector<32x96xf32>, vector<2x96xf32> -> vector<2x96xf32>
    %176 = arith.addf %175, %89 : vector<2x96xf32>
    %177 = vector.extract_strided_slice %174 {offsets = [0, 0], sizes = [2, 32], strides = [1, 1]} : vector<2x96xf32> to vector<2x32xf32>
    %178 = vector.extract_strided_slice %176 {offsets = [0, 0], sizes = [2, 32], strides = [1, 1]} : vector<2x96xf32> to vector<2x32xf32>
    %179 = arith.addf %177, %178 : vector<2x32xf32>
    %180 = arith.negf %179 : vector<2x32xf32>
    %181 = math.exp %180 : vector<2x32xf32>
    %cst_103 = arith.constant 1.000000e+00 : f32
    %182 = vector.broadcast %cst_103 : f32 to vector<2x32xf32>
    %183 = arith.addf %182, %181 : vector<2x32xf32>
    %184 = arith.divf %182, %183 : vector<2x32xf32>
    %185 = vector.extract_strided_slice %174 {offsets = [0, 32], sizes = [2, 32], strides = [1, 1]} : vector<2x96xf32> to vector<2x32xf32>
    %186 = vector.extract_strided_slice %176 {offsets = [0, 32], sizes = [2, 32], strides = [1, 1]} : vector<2x96xf32> to vector<2x32xf32>
    %187 = arith.addf %185, %186 : vector<2x32xf32>
    %188 = arith.negf %187 : vector<2x32xf32>
    %189 = math.exp %188 : vector<2x32xf32>
    %cst_104 = arith.constant 1.000000e+00 : f32
    %190 = vector.broadcast %cst_104 : f32 to vector<2x32xf32>
    %191 = arith.addf %190, %189 : vector<2x32xf32>
    %192 = arith.divf %190, %191 : vector<2x32xf32>
    %193 = vector.extract_strided_slice %174 {offsets = [0, 64], sizes = [2, 32], strides = [1, 1]} : vector<2x96xf32> to vector<2x32xf32>
    %194 = vector.extract_strided_slice %176 {offsets = [0, 64], sizes = [2, 32], strides = [1, 1]} : vector<2x96xf32> to vector<2x32xf32>
    %195 = arith.mulf %184, %194 : vector<2x32xf32>
    %196 = arith.addf %193, %195 : vector<2x32xf32>
    %197 = math.tanh %196 : vector<2x32xf32>
    %cst_105 = arith.constant 1.000000e+00 : f32
    %198 = vector.broadcast %cst_105 : f32 to vector<2x32xf32>
    %199 = arith.subf %198, %192 : vector<2x32xf32>
    %200 = arith.mulf %199, %197 : vector<2x32xf32>
    %201 = arith.mulf %192, %171 : vector<2x32xf32>
    %202 = arith.addf %200, %201 : vector<2x32xf32>
    %203 = vector.extract_strided_slice %85 {offsets = [6, 0], sizes = [2, 96], strides = [1, 1]} : vector<16x96xf32> to vector<2x96xf32>
    %204 = vector.extract_strided_slice %85 {offsets = [8, 0], sizes = [2, 96], strides = [1, 1]} : vector<16x96xf32> to vector<2x96xf32>
    %205 = arith.select %108, %203, %204 : vector<2x96xi1>, vector<2x96xf32>
    %cst_106 = arith.constant dense<0.000000e+00> : vector<2x96xf32>
    %206 = tpu.matmul %202, %86, %cst_106 {dimension_numbers = #tpu.dot_dimension_numbers<[1], [0], [0], [1], [0, 0, 1, 1], [], []>} : vector<2x32xf32>, vector<32x96xf32>, vector<2x96xf32> -> vector<2x96xf32>
    %207 = arith.addf %206, %89 : vector<2x96xf32>
    %208 = vector.extract_strided_slice %205 {offsets = [0, 0], sizes = [2, 32], strides = [1, 1]} : vector<2x96xf32> to vector<2x32xf32>
    %209 = vector.extract_strided_slice %207 {offsets = [0, 0], sizes = [2, 32], strides = [1, 1]} : vector<2x96xf32> to vector<2x32xf32>
    %210 = arith.addf %208, %209 : vector<2x32xf32>
    %211 = arith.negf %210 : vector<2x32xf32>
    %212 = math.exp %211 : vector<2x32xf32>
    %cst_107 = arith.constant 1.000000e+00 : f32
    %213 = vector.broadcast %cst_107 : f32 to vector<2x32xf32>
    %214 = arith.addf %213, %212 : vector<2x32xf32>
    %215 = arith.divf %213, %214 : vector<2x32xf32>
    %216 = vector.extract_strided_slice %205 {offsets = [0, 32], sizes = [2, 32], strides = [1, 1]} : vector<2x96xf32> to vector<2x32xf32>
    %217 = vector.extract_strided_slice %207 {offsets = [0, 32], sizes = [2, 32], strides = [1, 1]} : vector<2x96xf32> to vector<2x32xf32>
    %218 = arith.addf %216, %217 : vector<2x32xf32>
    %219 = arith.negf %218 : vector<2x32xf32>
    %220 = math.exp %219 : vector<2x32xf32>
    %cst_108 = arith.constant 1.000000e+00 : f32
    %221 = vector.broadcast %cst_108 : f32 to vector<2x32xf32>
    %222 = arith.addf %221, %220 : vector<2x32xf32>
    %223 = arith.divf %221, %222 : vector<2x32xf32>
    %224 = vector.extract_strided_slice %205 {offsets = [0, 64], sizes = [2, 32], strides = [1, 1]} : vector<2x96xf32> to vector<2x32xf32>
    %225 = vector.extract_strided_slice %207 {offsets = [0, 64], sizes = [2, 32], strides = [1, 1]} : vector<2x96xf32> to vector<2x32xf32>
    %226 = arith.mulf %215, %225 : vector<2x32xf32>
    %227 = arith.addf %224, %226 : vector<2x32xf32>
    %228 = math.tanh %227 : vector<2x32xf32>
    %cst_109 = arith.constant 1.000000e+00 : f32
    %229 = vector.broadcast %cst_109 : f32 to vector<2x32xf32>
    %230 = arith.subf %229, %223 : vector<2x32xf32>
    %231 = arith.mulf %230, %228 : vector<2x32xf32>
    %232 = arith.mulf %223, %202 : vector<2x32xf32>
    %233 = arith.addf %231, %232 : vector<2x32xf32>
    %234 = vector.extract_strided_slice %85 {offsets = [8, 0], sizes = [2, 96], strides = [1, 1]} : vector<16x96xf32> to vector<2x96xf32>
    %235 = vector.extract_strided_slice %85 {offsets = [6, 0], sizes = [2, 96], strides = [1, 1]} : vector<16x96xf32> to vector<2x96xf32>
    %236 = arith.select %108, %234, %235 : vector<2x96xi1>, vector<2x96xf32>
    %cst_110 = arith.constant dense<0.000000e+00> : vector<2x96xf32>
    %237 = tpu.matmul %233, %86, %cst_110 {dimension_numbers = #tpu.dot_dimension_numbers<[1], [0], [0], [1], [0, 0, 1, 1], [], []>} : vector<2x32xf32>, vector<32x96xf32>, vector<2x96xf32> -> vector<2x96xf32>
    %238 = arith.addf %237, %89 : vector<2x96xf32>
    %239 = vector.extract_strided_slice %236 {offsets = [0, 0], sizes = [2, 32], strides = [1, 1]} : vector<2x96xf32> to vector<2x32xf32>
    %240 = vector.extract_strided_slice %238 {offsets = [0, 0], sizes = [2, 32], strides = [1, 1]} : vector<2x96xf32> to vector<2x32xf32>
    %241 = arith.addf %239, %240 : vector<2x32xf32>
    %242 = arith.negf %241 : vector<2x32xf32>
    %243 = math.exp %242 : vector<2x32xf32>
    %cst_111 = arith.constant 1.000000e+00 : f32
    %244 = vector.broadcast %cst_111 : f32 to vector<2x32xf32>
    %245 = arith.addf %244, %243 : vector<2x32xf32>
    %246 = arith.divf %244, %245 : vector<2x32xf32>
    %247 = vector.extract_strided_slice %236 {offsets = [0, 32], sizes = [2, 32], strides = [1, 1]} : vector<2x96xf32> to vector<2x32xf32>
    %248 = vector.extract_strided_slice %238 {offsets = [0, 32], sizes = [2, 32], strides = [1, 1]} : vector<2x96xf32> to vector<2x32xf32>
    %249 = arith.addf %247, %248 : vector<2x32xf32>
    %250 = arith.negf %249 : vector<2x32xf32>
    %251 = math.exp %250 : vector<2x32xf32>
    %cst_112 = arith.constant 1.000000e+00 : f32
    %252 = vector.broadcast %cst_112 : f32 to vector<2x32xf32>
    %253 = arith.addf %252, %251 : vector<2x32xf32>
    %254 = arith.divf %252, %253 : vector<2x32xf32>
    %255 = vector.extract_strided_slice %236 {offsets = [0, 64], sizes = [2, 32], strides = [1, 1]} : vector<2x96xf32> to vector<2x32xf32>
    %256 = vector.extract_strided_slice %238 {offsets = [0, 64], sizes = [2, 32], strides = [1, 1]} : vector<2x96xf32> to vector<2x32xf32>
    %257 = arith.mulf %246, %256 : vector<2x32xf32>
    %258 = arith.addf %255, %257 : vector<2x32xf32>
    %259 = math.tanh %258 : vector<2x32xf32>
    %cst_113 = arith.constant 1.000000e+00 : f32
    %260 = vector.broadcast %cst_113 : f32 to vector<2x32xf32>
    %261 = arith.subf %260, %254 : vector<2x32xf32>
    %262 = arith.mulf %261, %259 : vector<2x32xf32>
    %263 = arith.mulf %254, %233 : vector<2x32xf32>
    %264 = arith.addf %262, %263 : vector<2x32xf32>
    %265 = vector.extract_strided_slice %85 {offsets = [10, 0], sizes = [2, 96], strides = [1, 1]} : vector<16x96xf32> to vector<2x96xf32>
    %266 = vector.extract_strided_slice %85 {offsets = [4, 0], sizes = [2, 96], strides = [1, 1]} : vector<16x96xf32> to vector<2x96xf32>
    %267 = arith.select %108, %265, %266 : vector<2x96xi1>, vector<2x96xf32>
    %cst_114 = arith.constant dense<0.000000e+00> : vector<2x96xf32>
    %268 = tpu.matmul %264, %86, %cst_114 {dimension_numbers = #tpu.dot_dimension_numbers<[1], [0], [0], [1], [0, 0, 1, 1], [], []>} : vector<2x32xf32>, vector<32x96xf32>, vector<2x96xf32> -> vector<2x96xf32>
    %269 = arith.addf %268, %89 : vector<2x96xf32>
    %270 = vector.extract_strided_slice %267 {offsets = [0, 0], sizes = [2, 32], strides = [1, 1]} : vector<2x96xf32> to vector<2x32xf32>
    %271 = vector.extract_strided_slice %269 {offsets = [0, 0], sizes = [2, 32], strides = [1, 1]} : vector<2x96xf32> to vector<2x32xf32>
    %272 = arith.addf %270, %271 : vector<2x32xf32>
    %273 = arith.negf %272 : vector<2x32xf32>
    %274 = math.exp %273 : vector<2x32xf32>
    %cst_115 = arith.constant 1.000000e+00 : f32
    %275 = vector.broadcast %cst_115 : f32 to vector<2x32xf32>
    %276 = arith.addf %275, %274 : vector<2x32xf32>
    %277 = arith.divf %275, %276 : vector<2x32xf32>
    %278 = vector.extract_strided_slice %267 {offsets = [0, 32], sizes = [2, 32], strides = [1, 1]} : vector<2x96xf32> to vector<2x32xf32>
    %279 = vector.extract_strided_slice %269 {offsets = [0, 32], sizes = [2, 32], strides = [1, 1]} : vector<2x96xf32> to vector<2x32xf32>
    %280 = arith.addf %278, %279 : vector<2x32xf32>
    %281 = arith.negf %280 : vector<2x32xf32>
    %282 = math.exp %281 : vector<2x32xf32>
    %cst_116 = arith.constant 1.000000e+00 : f32
    %283 = vector.broadcast %cst_116 : f32 to vector<2x32xf32>
    %284 = arith.addf %283, %282 : vector<2x32xf32>
    %285 = arith.divf %283, %284 : vector<2x32xf32>
    %286 = vector.extract_strided_slice %267 {offsets = [0, 64], sizes = [2, 32], strides = [1, 1]} : vector<2x96xf32> to vector<2x32xf32>
    %287 = vector.extract_strided_slice %269 {offsets = [0, 64], sizes = [2, 32], strides = [1, 1]} : vector<2x96xf32> to vector<2x32xf32>
    %288 = arith.mulf %277, %287 : vector<2x32xf32>
    %289 = arith.addf %286, %288 : vector<2x32xf32>
    %290 = math.tanh %289 : vector<2x32xf32>
    %cst_117 = arith.constant 1.000000e+00 : f32
    %291 = vector.broadcast %cst_117 : f32 to vector<2x32xf32>
    %292 = arith.subf %291, %285 : vector<2x32xf32>
    %293 = arith.mulf %292, %290 : vector<2x32xf32>
    %294 = arith.mulf %285, %264 : vector<2x32xf32>
    %295 = arith.addf %293, %294 : vector<2x32xf32>
    %296 = vector.extract_strided_slice %85 {offsets = [12, 0], sizes = [2, 96], strides = [1, 1]} : vector<16x96xf32> to vector<2x96xf32>
    %297 = vector.extract_strided_slice %85 {offsets = [2, 0], sizes = [2, 96], strides = [1, 1]} : vector<16x96xf32> to vector<2x96xf32>
    %298 = arith.select %108, %296, %297 : vector<2x96xi1>, vector<2x96xf32>
    %cst_118 = arith.constant dense<0.000000e+00> : vector<2x96xf32>
    %299 = tpu.matmul %295, %86, %cst_118 {dimension_numbers = #tpu.dot_dimension_numbers<[1], [0], [0], [1], [0, 0, 1, 1], [], []>} : vector<2x32xf32>, vector<32x96xf32>, vector<2x96xf32> -> vector<2x96xf32>
    %300 = arith.addf %299, %89 : vector<2x96xf32>
    %301 = vector.extract_strided_slice %298 {offsets = [0, 0], sizes = [2, 32], strides = [1, 1]} : vector<2x96xf32> to vector<2x32xf32>
    %302 = vector.extract_strided_slice %300 {offsets = [0, 0], sizes = [2, 32], strides = [1, 1]} : vector<2x96xf32> to vector<2x32xf32>
    %303 = arith.addf %301, %302 : vector<2x32xf32>
    %304 = arith.negf %303 : vector<2x32xf32>
    %305 = math.exp %304 : vector<2x32xf32>
    %cst_119 = arith.constant 1.000000e+00 : f32
    %306 = vector.broadcast %cst_119 : f32 to vector<2x32xf32>
    %307 = arith.addf %306, %305 : vector<2x32xf32>
    %308 = arith.divf %306, %307 : vector<2x32xf32>
    %309 = vector.extract_strided_slice %298 {offsets = [0, 32], sizes = [2, 32], strides = [1, 1]} : vector<2x96xf32> to vector<2x32xf32>
    %310 = vector.extract_strided_slice %300 {offsets = [0, 32], sizes = [2, 32], strides = [1, 1]} : vector<2x96xf32> to vector<2x32xf32>
    %311 = arith.addf %309, %310 : vector<2x32xf32>
    %312 = arith.negf %311 : vector<2x32xf32>
    %313 = math.exp %312 : vector<2x32xf32>
    %cst_120 = arith.constant 1.000000e+00 : f32
    %314 = vector.broadcast %cst_120 : f32 to vector<2x32xf32>
    %315 = arith.addf %314, %313 : vector<2x32xf32>
    %316 = arith.divf %314, %315 : vector<2x32xf32>
    %317 = vector.extract_strided_slice %298 {offsets = [0, 64], sizes = [2, 32], strides = [1, 1]} : vector<2x96xf32> to vector<2x32xf32>
    %318 = vector.extract_strided_slice %300 {offsets = [0, 64], sizes = [2, 32], strides = [1, 1]} : vector<2x96xf32> to vector<2x32xf32>
    %319 = arith.mulf %308, %318 : vector<2x32xf32>
    %320 = arith.addf %317, %319 : vector<2x32xf32>
    %321 = math.tanh %320 : vector<2x32xf32>
    %cst_121 = arith.constant 1.000000e+00 : f32
    %322 = vector.broadcast %cst_121 : f32 to vector<2x32xf32>
    %323 = arith.subf %322, %316 : vector<2x32xf32>
    %324 = arith.mulf %323, %321 : vector<2x32xf32>
    %325 = arith.mulf %316, %295 : vector<2x32xf32>
    %326 = arith.addf %324, %325 : vector<2x32xf32>
    %327 = vector.extract_strided_slice %85 {offsets = [14, 0], sizes = [2, 96], strides = [1, 1]} : vector<16x96xf32> to vector<2x96xf32>
    %328 = vector.extract_strided_slice %85 {offsets = [0, 0], sizes = [2, 96], strides = [1, 1]} : vector<16x96xf32> to vector<2x96xf32>
    %329 = arith.select %108, %327, %328 : vector<2x96xi1>, vector<2x96xf32>
    %cst_122 = arith.constant dense<0.000000e+00> : vector<2x96xf32>
    %330 = tpu.matmul %326, %86, %cst_122 {dimension_numbers = #tpu.dot_dimension_numbers<[1], [0], [0], [1], [0, 0, 1, 1], [], []>} : vector<2x32xf32>, vector<32x96xf32>, vector<2x96xf32> -> vector<2x96xf32>
    %331 = arith.addf %330, %89 : vector<2x96xf32>
    %332 = vector.extract_strided_slice %329 {offsets = [0, 0], sizes = [2, 32], strides = [1, 1]} : vector<2x96xf32> to vector<2x32xf32>
    %333 = vector.extract_strided_slice %331 {offsets = [0, 0], sizes = [2, 32], strides = [1, 1]} : vector<2x96xf32> to vector<2x32xf32>
    %334 = arith.addf %332, %333 : vector<2x32xf32>
    %335 = arith.negf %334 : vector<2x32xf32>
    %336 = math.exp %335 : vector<2x32xf32>
    %cst_123 = arith.constant 1.000000e+00 : f32
    %337 = vector.broadcast %cst_123 : f32 to vector<2x32xf32>
    %338 = arith.addf %337, %336 : vector<2x32xf32>
    %339 = arith.divf %337, %338 : vector<2x32xf32>
    %340 = vector.extract_strided_slice %329 {offsets = [0, 32], sizes = [2, 32], strides = [1, 1]} : vector<2x96xf32> to vector<2x32xf32>
    %341 = vector.extract_strided_slice %331 {offsets = [0, 32], sizes = [2, 32], strides = [1, 1]} : vector<2x96xf32> to vector<2x32xf32>
    %342 = arith.addf %340, %341 : vector<2x32xf32>
    %343 = arith.negf %342 : vector<2x32xf32>
    %344 = math.exp %343 : vector<2x32xf32>
    %cst_124 = arith.constant 1.000000e+00 : f32
    %345 = vector.broadcast %cst_124 : f32 to vector<2x32xf32>
    %346 = arith.addf %345, %344 : vector<2x32xf32>
    %347 = arith.divf %345, %346 : vector<2x32xf32>
    %348 = vector.extract_strided_slice %329 {offsets = [0, 64], sizes = [2, 32], strides = [1, 1]} : vector<2x96xf32> to vector<2x32xf32>
    %349 = vector.extract_strided_slice %331 {offsets = [0, 64], sizes = [2, 32], strides = [1, 1]} : vector<2x96xf32> to vector<2x32xf32>
    %350 = arith.mulf %339, %349 : vector<2x32xf32>
    %351 = arith.addf %348, %350 : vector<2x32xf32>
    %352 = math.tanh %351 : vector<2x32xf32>
    %cst_125 = arith.constant 1.000000e+00 : f32
    %353 = vector.broadcast %cst_125 : f32 to vector<2x32xf32>
    %354 = arith.subf %353, %347 : vector<2x32xf32>
    %355 = arith.mulf %354, %352 : vector<2x32xf32>
    %356 = arith.mulf %347, %326 : vector<2x32xf32>
    %357 = arith.addf %355, %356 : vector<2x32xf32>
    %c0_126 = arith.constant 0 : index
    %c0_127 = arith.constant 0 : index
    %358 = vector.load %arg6[%c0_126, %c0_127] : memref<32x4xf32, #tpu.memory_space<vmem>>, vector<32x4xf32>
    %cst_128 = arith.constant dense<0.000000e+00> : vector<2x4xf32>
    %359 = tpu.matmul %357, %358, %cst_128 {dimension_numbers = #tpu.dot_dimension_numbers<[1], [0], [0], [1], [0, 0, 1, 1], [], []>} : vector<2x32xf32>, vector<32x4xf32>, vector<2x4xf32> -> vector<2x4xf32>
    %c0_129 = arith.constant 0 : index
    %c0_130 = arith.constant 0 : index
    %360 = vector.load %arg7[%c0_129, %c0_130] : memref<1x4xf32, #tpu.memory_space<vmem>>, vector<1x4xf32>
    %361 = vector.broadcast %360 : vector<1x4xf32> to vector<2x4xf32>
    %362 = arith.addf %359, %361 : vector<2x4xf32>
    %c0_131 = arith.constant 0 : index
    %c0_132 = arith.constant 0 : index
    %363 = vector.load %arg8[%c0_131, %c0_132] : memref<2x4xf32, #tpu.memory_space<vmem>>, vector<2x4xf32>
    tpu.vector_store %arg8[%c0_131, %c0_132], %362 {strides = array<i32>} : memref<2x4xf32, #tpu.memory_space<vmem>>, vector<2x4xf32>,
    return
  }
}

</mosaic_0001>

<llo_original>
// kernel: rnn_forward.1
$region0: #{rnn_forward.1}
  #allocation0 [shape = 'u32[]', space=smem, size = 0x4, offset = 0x4, fixed_abs, tag = 'smem constant byte address 0x4 - core index']
  #allocation1 [shape = 'u32[72,128]{1,0:T(1,128)}', space=vmem, size = 0x9000, scoped, tag = 'internal scratch']
  #allocation2 [shape = 'f32[16,32]{1,0:T(8,128)}', space=vmem, size = 0x2000, scoped, tag = 'scratch operand']
  %s0 = inlined_call_operand.vmem [shape: s32[2,8], index: 0, kind: input, shape index: {}]
  %s1 = inlined_call_operand.vmem [shape: f32[100,1,32], index: 1, kind: input, shape index: {}]
  %s2 = inlined_call_operand.vmem [shape: f32[32,96], index: 2, kind: input, shape index: {}]
  %s3 = inlined_call_operand.vmem [shape: f32[1,96], index: 3, kind: input, shape index: {}]
  %s4 = inlined_call_operand.vmem [shape: f32[32,96], index: 4, kind: input, shape index: {}]
  %s5 = inlined_call_operand.vmem [shape: f32[1,96], index: 5, kind: input, shape index: {}]
  %s6 = inlined_call_operand.vmem [shape: f32[32,4], index: 6, kind: input, shape index: {}]
  %s7 = inlined_call_operand.vmem [shape: f32[1,4], index: 7, kind: input, shape index: {}]
  %s8 = inlined_call_operand.hbm [shape: f32[2,4], index: 8, kind: output, shape index: {}]
  %s9 = sld [smem:[#allocation0]]
  $region46: #{rnn_forward.1} parent=0
    _
  %s11 = ssub.s32 1, %s9
  %s12 = scalar_select 0, %s11, %s9
  $region1: #{rnn_forward.1} parent=0
    #allocation3 [shape = 'u8[1024]{0}', space=smem, size = 0x400, scoped, tag = 'input window, operand 0, single buffered']
    #allocation4 [shape = 's32[1]{0}', space=sflag, size = 0x4, scoped, tag = 'scoped memory for rnn_forward.1']
    #allocation5 [shape = 's32[1]{0}', space=sflag, size = 0x4, scoped, tag = 'scoped memory for rnn_forward.1']
    #allocation6 [shape = 'u8[1024]{0}', space=vmem, size = 0x400, scoped, tag = 'output window, operand 0, single buffered']
    %13 = vsyncpa [#allocation5], 0
    %14 = vsyncpa [#allocation4], 0
    // Predicated region
    $region2: #{rnn_forward.1} parent=1 // pred_check
      _
    $region3: #{rnn_forward.1} parent=1 // pred_check_branch
      %16 = sbr.rel (0) target = $region5
    $region4: #{rnn_forward.1} parent=1 // pred_region
      %18 = vsyncadd [#allocation5], 0
      %s20 = sshll.u32 %s0, 4
      %s21 = int_to_ptr.vmem [resolvable:$true] %s20
      %23 = dma.vmem_to_smem %s21, 32, [#allocation3], [#allocation5]
    $region5: #{rnn_forward.1} parent=1 // pred_fallthru
      _
    // Predicated region
    $region6: #{rnn_forward.1} parent=1 // pred_check
      _
    $region7: #{rnn_forward.1} parent=1 // pred_check_branch
      %25 = sbr.rel (0) target = $region9
    $region8: #{rnn_forward.1} parent=1 // pred_region
      _
    $region9: #{rnn_forward.1} parent=1 // pred_fallthru
      _
    // Predicated region
    $region10: #{rnn_forward.1} parent=1 // pred_check
      _
    $region11: #{rnn_forward.1} parent=1 // pred_check_branch
      %27 = sbr.rel (0) target = $region13
    $region12: #{rnn_forward.1} parent=1 // pred_region
      _
    $region13: #{rnn_forward.1} parent=1 // pred_fallthru
      _
    // Predicated region
    $region14: #{rnn_forward.1} parent=1 // pred_check
      _
    $region15: #{rnn_forward.1} parent=1 // pred_check_branch
      %29 = sbr.rel (0) target = $region17
    $region16: #{rnn_forward.1} parent=1 // pred_region
      _
    $region17: #{rnn_forward.1} parent=1 // pred_fallthru
      _
    // Predicated region
    $region18: #{rnn_forward.1} parent=1 // pred_check
      _
    $region19: #{rnn_forward.1} parent=1 // pred_check_branch
      %31 = sbr.rel (0) target = $region21
    $region20: #{rnn_forward.1} parent=1 // pred_region
      _
    $region21: #{rnn_forward.1} parent=1 // pred_fallthru
      _
    // Predicated region
    $region22: #{rnn_forward.1} parent=1 // pred_check
      _
    $region23: #{rnn_forward.1} parent=1 // pred_check_branch
      %33 = sbr.rel (0) target = $region25
    $region24: #{rnn_forward.1} parent=1 // pred_region
      _
    $region25: #{rnn_forward.1} parent=1 // pred_fallthru
      _
    // Predicated region
    $region26: #{rnn_forward.1} parent=1 // pred_check
      _
    $region27: #{rnn_forward.1} parent=1 // pred_check_branch
      %35 = sbr.rel (0) target = $region29
    $region28: #{rnn_forward.1} parent=1 // pred_region
      _
    $region29: #{rnn_forward.1} parent=1 // pred_fallthru
      _
    // Predicated region
    $region30: #{rnn_forward.1} parent=1 // pred_check
      _
    $region31: #{rnn_forward.1} parent=1 // pred_check_branch
      %37 = sbr.rel (0) target = $region33
    $region32: #{rnn_forward.1} parent=1 // pred_region
      _
    $region33: #{rnn_forward.1} parent=1 // pred_fallthru
      _
    // Predicated region
    $region34: #{rnn_forward.1} parent=1 // pred_check
      _
    $region35: #{rnn_forward.1} parent=1 // pred_check_branch
      %39 = sbr.rel (0) target = $region37
    $region36: #{rnn_forward.1} parent=1 // pred_region
      %41 = dma.done [#allocation5], 32
    $region37: #{rnn_forward.1} parent=1 // pred_fallthru
      _
    %42 = sfence
    %s43 = sld [smem:[#allocation3]]
    %s44 = scalar_lea.vmem %s1, %s43
    %v45 = vld [vmem:[%s44] sm:$0x1]
    %vm46 = vcmask 253952
    %47 = vst.msk [vmem:[#allocation2] sm:$0x1] %vm46, %v45
    %s48 = sld [smem:[#allocation3 + $0x80]]
    %s49 = scalar_lea.vmem %s1, %s48
    %v50 = vld [vmem:[%s49] sm:$0x1]
    %51 = vst.msk [vmem:[#allocation2 + $0x1] sm:$0x1] %vm46, %v50
    %s52 = sld [smem:[#allocation3 + $0x1]]
    %s53 = scalar_lea.vmem %s1, %s52
    %v54 = vld [vmem:[%s53] sm:$0x1]
    %55 = vst.msk [vmem:[#allocation2 + $0x2] sm:$0x1] %vm46, %v54
    %s56 = sld [smem:[#allocation3 + $0x81]]
    %s57 = scalar_lea.vmem %s1, %s56
    %v58 = vld [vmem:[%s57] sm:$0x1]
    %59 = vst.msk [vmem:[#allocation2 + $0x3] sm:$0x1] %vm46, %v58
    %s60 = sld [smem:[#allocation3 + $0x2]]
    %s61 = scalar_lea.vmem %s1, %s60
    %v62 = vld [vmem:[%s61] sm:$0x1]
    %63 = vst.msk [vmem:[#allocation2 + $0x4] sm:$0x1] %vm46, %v62
    %s64 = sld [smem:[#allocation3 + $0x82]]
    %s65 = scalar_lea.vmem %s1, %s64
    %v66 = vld [vmem:[%s65] sm:$0x1]
    %67 = vst.msk [vmem:[#allocation2 + $0x5] sm:$0x1] %vm46, %v66
    %s68 = sld [smem:[#allocation3 + $0x3]]
    %s69 = scalar_lea.vmem %s1, %s68
    %v70 = vld [vmem:[%s69] sm:$0x1]
    %71 = vst.msk [vmem:[#allocation2 + $0x6] sm:$0x1] %vm46, %v70
    %s72 = sld [smem:[#allocation3 + $0x83]]
    %s73 = scalar_lea.vmem %s1, %s72
    %v74 = vld [vmem:[%s73] sm:$0x1]
    %75 = vst.msk [vmem:[#allocation2 + $0x7] sm:$0x1] %vm46, %v74
    %s76 = sld [smem:[#allocation3 + $0x4]]
    %s77 = scalar_lea.vmem %s1, %s76
    %v78 = vld [vmem:[%s77] sm:$0x1]
    %79 = vst.msk [vmem:[#allocation2 + $0x8] sm:$0x1] %vm46, %v78
    %s80 = sld [smem:[#allocation3 + $0x84]]
    %s81 = scalar_lea.vmem %s1, %s80
    %v82 = vld [vmem:[%s81] sm:$0x1]
    %83 = vst.msk [vmem:[#allocation2 + $0x9] sm:$0x1] %vm46, %v82
    %s84 = sld [smem:[#allocation3 + $0x5]]
    %s85 = scalar_lea.vmem %s1, %s84
    %v86 = vld [vmem:[%s85] sm:$0x1]
    %87 = vst.msk [vmem:[#allocation2 + $0xa] sm:$0x1] %vm46, %v86
    %s88 = sld [smem:[#allocation3 + $0x85]]
    %s89 = scalar_lea.vmem %s1, %s88
    %v90 = vld [vmem:[%s89] sm:$0x1]
    %91 = vst.msk [vmem:[#allocation2 + $0xb] sm:$0x1] %vm46, %v90
    %s92 = sld [smem:[#allocation3 + $0x6]]
    %s93 = scalar_lea.vmem %s1, %s92
    %v94 = vld [vmem:[%s93] sm:$0x1]
    %95 = vst.msk [vmem:[#allocation2 + $0xc] sm:$0x1] %vm46, %v94
    %s96 = sld [smem:[#allocation3 + $0x86]]
    %s97 = scalar_lea.vmem %s1, %s96
    %v98 = vld [vmem:[%s97] sm:$0x1]
    %99 = vst.msk [vmem:[#allocation2 + $0xd] sm:$0x1] %vm46, %v98
    %s100 = sld [smem:[#allocation3 + $0x7]]
    %s101 = scalar_lea.vmem %s1, %s100
    %v102 = vld [vmem:[%s101] sm:$0x1]
    %103 = vst.msk [vmem:[#allocation2 + $0xe] sm:$0x1] %vm46, %v102
    %s104 = sld [smem:[#allocation3 + $0x87]]
    %s105 = scalar_lea.vmem %s1, %s104
    %v106 = vld [vmem:[%s105] sm:$0x1]
    %107 = vst.msk [vmem:[#allocation2 + $0xf] sm:$0x1] %vm46, %v106
    %v108 = vld [vmem:[#allocation2] sm:$0xff]
    %v109 = vld [vmem:[#allocation2 + $0x8] sm:$0xff]
    %v110 = vld [vmem:[%s2] sm:$0xff]
    %v111 = vld [vmem:[%s2 + $0x8] sm:$0xff]
    %v112 = vld [vmem:[%s2 + $0x10] sm:$0xff]
    %v113 = vld [vmem:[%s2 + $0x18] sm:$0xff]
    %v114 = vld [vmem:[%s3] sm:$0x1]
    %v116 = vperm.slane %v114, 0
    %vm118 = vcmask 261120
    %v120 = vsel %vm118, %v108, 0
    %v123 = vsel %vm118, %v109, 0
    %125 = vmatpush.msra.mxu0 0.0
    %126 = vmatpush.msra.mxu0 0.0
    %127 = vmatpush.msra.mxu0 0.0
    %128 = vmatpush.msra.mxu0 0.0
    %129 = vmatpush.msra.mxu0 0.0
    %130 = vmatpush.msra.mxu0 0.0
    %131 = vmatpush.msra.mxu0 0.0
    %132 = vmatpush.msra.mxu0 0.0
    %133 = vmatpush.msra.mxu0 0.0
    %134 = vmatpush.msra.mxu0 0.0
    %135 = vmatpush.msra.mxu0 0.0
    %136 = vmatpush.msra.mxu0 0.0
    %137 = vmatpush.msra.mxu0 %v113
    %138 = vmatpush.msra.mxu0 %v112
    %139 = vmatpush.msra.mxu0 %v111
    %140 = vmatpush.msra.mxu0 %v110
    %141 = vmatmul.f32.gmra.mxu0 %v120
    %v142 = vpop.f32.mrf.mxu0
    %v143 = vadd.f32 %v116, %v142
    %144 = vmatmul.f32.gmra.mxu0 %v123
    %v145 = vpop.f32.mrf.mxu0
    %v146 = vadd.f32 %v116, %v145
    %147 = vdwg.mxu0
    %v148 = vld [vmem:[%s4] sm:$0xff]
    %v149 = vld [vmem:[%s4 + $0x8] sm:$0xff]
    %v150 = vld [vmem:[%s4 + $0x10] sm:$0xff]
    %v151 = vld [vmem:[%s4 + $0x18] sm:$0xff]
    %v152 = vld [vmem:[%s5] sm:$0x1]
    %v154 = vperm.slane %v152, 0
    %v156 = vlaneseq
    %v157 = vand.u32 %v156, 127
    %vm158 = vcmp.lt.s32.totalorder %v157, 0
    %v159 = vsub.s32 0, %v157
    %v160 = vsel %vm158, %v159, %v157
    %v161 = vshrl.u32 %v160, 5
    %v162 = vand.u32 %v160, 31
    %v163 = vsub.s32 0, %v162
    %v164 = vsel %vm158, %v163, %v162
    %vm165 = vcmp.ne.s32.totalorder %v164, 0
    %vm166 = vcmp.lt.s32.totalorder %v164, 0
    %vm167 = vmand %vm166, %vm165
    %v168 = vadd.s32 %v164, 32
    %v169 = vsel %vm167, %v168, %v164
    %vm170 = vcmp.lt.s32.totalorder %v169, 16
    %v172 = vrot.slane %v146, 6
    %v174 = vsel %vm170, %v143, %v172
    %v176 = vsel %vm118, 0.0, 0
    %178 = vmatpush.msra.mxu0 0.0
    %179 = vmatpush.msra.mxu0 0.0
    %180 = vmatpush.msra.mxu0 0.0
    %181 = vmatpush.msra.mxu0 0.0
    %182 = vmatpush.msra.mxu0 0.0
    %183 = vmatpush.msra.mxu0 0.0
    %184 = vmatpush.msra.mxu0 0.0
    %185 = vmatpush.msra.mxu0 0.0
    %186 = vmatpush.msra.mxu0 0.0
    %187 = vmatpush.msra.mxu0 0.0
    %188 = vmatpush.msra.mxu0 0.0
    %189 = vmatpush.msra.mxu0 0.0
    %190 = vmatpush.msra.mxu0 %v151
    %191 = vmatpush.msra.mxu0 %v150
    %192 = vmatpush.msra.mxu0 %v149
    %193 = vmatpush.msra.mxu0 %v148
    %194 = vmatmul.f32.gmra.mxu0 %v176
    %v195 = vpop.f32.mrf.mxu0
    %v196 = vadd.f32 %v154, %v195
    %197 = vdwg.mxu0
    %v198 = vadd.f32 %v174, %v196
    %v199 = vxor.u32 %v198, 2147483648
    %v200 = vmul.f32 %v199, 1.442695
    %v201 = vpow.pop %v200
    %v202 = vadd.f32 %v201, 1.0
    %v203 = vrcp.pop %v202
    %v204 = vmul.f32 %v202, %v203
    %v205 = vsub.f32 1.0, %v204
    %v206 = vmul.f32 %v203, %v205
    %v207 = vadd.f32 %v203, %v206
    %vm208 = vweird.f32 %v202
    %vm209 = vweird.f32 %v203
    %vm210 = vmor %vm208, %vm209
    %v211 = vsel %vm210, %v203, %v207
    %v212 = vand.u32 2147483647, %v202
    %vm213 = vcmp.eq.f32.partialorder %v212, 8.507059e+37
    %v214 = vand.u32 %v202, 2147483648
    %v215 = vor.u32 1.1754944e-38, %v214
    %v216 = vsel %vm213, %v215, %v211
    %v217 = vmul.f32 1.0, %v216
    %219 = vrot.lane.b32.xlu0 %v196, 64
    %v220 = vpop.permute.xlu0 %219
    %v222 = vmul.f32 %v217, %v220
    %224 = vrot.lane.b32.xlu0 %v222, 64
    %v225 = vpop.permute.xlu0 %224
    %v227 = vadd.f32 %v174, %v225
    %v228 = vtanh.pop %v227
    %v229 = vsub.f32 1.0, %v217
    %231 = vrot.lane.b32.xlu0 %v228, 96
    %v232 = vpop.permute.xlu0 %231
    %v234 = vmul.f32 %v229, %v232
    %v235 = vmul.f32 %v217, 0.0
    %v236 = vadd.f32 %v234, %v235
    %v237 = vrot.slane %v146, 2
    %v239 = vsel %vm170, %v143, %v237
    %241 = vrot.lane.b32.xlu0 %v236, 96
    %v242 = vpop.permute.xlu0 %241
    %v243 = vsel %vm118, %v242, 0
    %245 = vmatpush.msra.mxu0 0.0
    %246 = vmatpush.msra.mxu0 0.0
    %247 = vmatpush.msra.mxu0 0.0
    %248 = vmatpush.msra.mxu0 0.0
    %249 = vmatpush.msra.mxu0 0.0
    %250 = vmatpush.msra.mxu0 0.0
    %251 = vmatpush.msra.mxu0 0.0
    %252 = vmatpush.msra.mxu0 0.0
    %253 = vmatpush.msra.mxu0 0.0
    %254 = vmatpush.msra.mxu0 0.0
    %255 = vmatpush.msra.mxu0 0.0
    %256 = vmatpush.msra.mxu0 0.0
    %257 = vmatpush.msra.mxu0 %v151
    %258 = vmatpush.msra.mxu0 %v150
    %259 = vmatpush.msra.mxu0 %v149
    %260 = vmatpush.msra.mxu0 %v148
    %261 = vmatmul.f32.gmra.mxu0 %v243
    %v262 = vpop.f32.mrf.mxu0
    %v263 = vadd.f32 %v154, %v262
    %264 = vdwg.mxu0
    %v266 = vrot.slane %v263, 6
    %v268 = vadd.f32 %v239, %v266
    %v269 = vxor.u32 %v268, 2147483648
    %v270 = vmul.f32 %v269, 1.442695
    %v271 = vpow.pop %v270
    %v272 = vadd.f32 %v271, 1.0
    %v273 = vrcp.pop %v272
    %v274 = vmul.f32 %v272, %v273
    %v275 = vsub.f32 1.0, %v274
    %v276 = vmul.f32 %v273, %v275
    %v277 = vadd.f32 %v273, %v276
    %vm278 = vweird.f32 %v272
    %vm279 = vweird.f32 %v273
    %vm280 = vmor %vm278, %vm279
    %v281 = vsel %vm280, %v273, %v277
    %v282 = vand.u32 2147483647, %v272
    %vm283 = vcmp.eq.f32.partialorder %v282, 8.507059e+37
    %v284 = vand.u32 %v272, 2147483648
    %v285 = vor.u32 1.1754944e-38, %v284
    %v286 = vsel %vm283, %v285, %v281
    %v287 = vmul.f32 1.0, %v286
    %288 = vrot.lane.b32.xlu0 %v266, 64
    %v289 = vpop.permute.xlu0 %288
    %v291 = vmul.f32 %v287, %v289
    %293 = vrot.lane.b32.xlu0 %v291, 64
    %v294 = vpop.permute.xlu0 %293
    %v296 = vadd.f32 %v239, %v294
    %v297 = vtanh.pop %v296
    %v298 = vsub.f32 1.0, %v287
    %300 = vrot.lane.b32.xlu0 %v297, 96
    %v301 = vpop.permute.xlu0 %300
    %v303 = vmul.f32 %v298, %v301
    %v304 = vrot.slane %v236, 6
    %v306 = vmul.f32 %v287, %v304
    %v307 = vadd.f32 %v303, %v306
    %v309 = vrot.slane %v307, 2
    %310 = vrot.lane.b32.xlu0 %v309, 96
    %v311 = vpop.permute.xlu0 %310
    %v312 = vsel %vm118, %v311, 0
    %314 = vmatpush.msra.mxu0 0.0
    %315 = vmatpush.msra.mxu0 0.0
    %316 = vmatpush.msra.mxu0 0.0
    %317 = vmatpush.msra.mxu0 0.0
    %318 = vmatpush.msra.mxu0 0.0
    %319 = vmatpush.msra.mxu0 0.0
    %320 = vmatpush.msra.mxu0 0.0
    %321 = vmatpush.msra.mxu0 0.0
    %322 = vmatpush.msra.mxu0 0.0
    %323 = vmatpush.msra.mxu0 0.0
    %324 = vmatpush.msra.mxu0 0.0
    %325 = vmatpush.msra.mxu0 0.0
    %326 = vmatpush.msra.mxu0 %v151
    %327 = vmatpush.msra.mxu0 %v150
    %328 = vmatpush.msra.mxu0 %v149
    %329 = vmatpush.msra.mxu0 %v148
    %330 = vmatmul.f32.gmra.mxu0 %v312
    %v331 = vpop.f32.mrf.mxu0
    %v332 = vadd.f32 %v154, %v331
    %333 = vdwg.mxu0
    %v335 = vrot.slane %v332, 4
    %v337 = vadd.f32 %v174, %v335
    %v338 = vxor.u32 %v337, 2147483648
    %v339 = vmul.f32 %v338, 1.442695
    %v340 = vpow.pop %v339
    %v341 = vadd.f32 %v340, 1.0
    %v342 = vrcp.pop %v341
    %v343 = vmul.f32 %v341, %v342
    %v344 = vsub.f32 1.0, %v343
    %v345 = vmul.f32 %v342, %v344
    %v346 = vadd.f32 %v342, %v345
    %vm347 = vweird.f32 %v341
    %vm348 = vweird.f32 %v342
    %vm349 = vmor %vm347, %vm348
    %v350 = vsel %vm349, %v342, %v346
    %v351 = vand.u32 2147483647, %v341
    %vm352 = vcmp.eq.f32.partialorder %v351, 8.507059e+37
    %v353 = vand.u32 %v341, 2147483648
    %v354 = vor.u32 1.1754944e-38, %v353
    %v355 = vsel %vm352, %v354, %v350
    %v356 = vmul.f32 1.0, %v355
    %357 = vrot.lane.b32.xlu0 %v335, 64
    %v358 = vpop.permute.xlu0 %357
    %v360 = vmul.f32 %v356, %v358
    %362 = vrot.lane.b32.xlu0 %v360, 64
    %v363 = vpop.permute.xlu0 %362
    %v365 = vadd.f32 %v174, %v363
    %v366 = vtanh.pop %v365
    %v367 = vsub.f32 1.0, %v356
    %369 = vrot.lane.b32.xlu0 %v366, 96
    %v370 = vpop.permute.xlu0 %369
    %v372 = vmul.f32 %v367, %v370
    %v373 = vrot.slane %v307, 6
    %v375 = vmul.f32 %v356, %v373
    %v376 = vadd.f32 %v372, %v375
    %v378 = vrot.slane %v376, 4
    %379 = vrot.lane.b32.xlu0 %v378, 96
    %v380 = vpop.permute.xlu0 %379
    %v381 = vsel %vm118, %v380, 0
    %383 = vmatpush.msra.mxu0 0.0
    %384 = vmatpush.msra.mxu0 0.0
    %385 = vmatpush.msra.mxu0 0.0
    %386 = vmatpush.msra.mxu0 0.0
    %387 = vmatpush.msra.mxu0 0.0
    %388 = vmatpush.msra.mxu0 0.0
    %389 = vmatpush.msra.mxu0 0.0
    %390 = vmatpush.msra.mxu0 0.0
    %391 = vmatpush.msra.mxu0 0.0
    %392 = vmatpush.msra.mxu0 0.0
    %393 = vmatpush.msra.mxu0 0.0
    %394 = vmatpush.msra.mxu0 0.0
    %395 = vmatpush.msra.mxu0 %v151
    %396 = vmatpush.msra.mxu0 %v150
    %397 = vmatpush.msra.mxu0 %v149
    %398 = vmatpush.msra.mxu0 %v148
    %399 = vmatmul.f32.gmra.mxu0 %v381
    %v400 = vpop.f32.mrf.mxu0
    %v401 = vadd.f32 %v154, %v400
    %402 = vdwg.mxu0
    %v404 = vrot.slane %v401, 2
    %v406 = vadd.f32 %v239, %v404
    %v407 = vxor.u32 %v406, 2147483648
    %v408 = vmul.f32 %v407, 1.442695
    %v409 = vpow.pop %v408
    %v410 = vadd.f32 %v409, 1.0
    %v411 = vrcp.pop %v410
    %v412 = vmul.f32 %v410, %v411
    %v413 = vsub.f32 1.0, %v412
    %v414 = vmul.f32 %v411, %v413
    %v415 = vadd.f32 %v411, %v414
    %vm416 = vweird.f32 %v410
    %vm417 = vweird.f32 %v411
    %vm418 = vmor %vm416, %vm417
    %v419 = vsel %vm418, %v411, %v415
    %v420 = vand.u32 2147483647, %v410
    %vm421 = vcmp.eq.f32.partialorder %v420, 8.507059e+37
    %v422 = vand.u32 %v410, 2147483648
    %v423 = vor.u32 1.1754944e-38, %v422
    %v424 = vsel %vm421, %v423, %v419
    %v425 = vmul.f32 1.0, %v424
    %426 = vrot.lane.b32.xlu0 %v404, 64
    %v427 = vpop.permute.xlu0 %426
    %v429 = vmul.f32 %v425, %v427
    %431 = vrot.lane.b32.xlu0 %v429, 64
    %v432 = vpop.permute.xlu0 %431
    %v434 = vadd.f32 %v239, %v432
    %v435 = vtanh.pop %v434
    %v436 = vsub.f32 1.0, %v425
    %438 = vrot.lane.b32.xlu0 %v435, 96
    %v439 = vpop.permute.xlu0 %438
    %v441 = vmul.f32 %v436, %v439
    %v442 = vrot.slane %v376, 6
    %v444 = vmul.f32 %v425, %v442
    %v445 = vadd.f32 %v441, %v444
    %v447 = vrot.slane %v143, 6
    %v449 = vsel %vm170, %v146, %v447
    %v451 = vrot.slane %v445, 6
    %452 = vrot.lane.b32.xlu0 %v451, 96
    %v453 = vpop.permute.xlu0 %452
    %v454 = vsel %vm118, %v453, 0
    %456 = vmatpush.msra.mxu0 0.0
    %457 = vmatpush.msra.mxu0 0.0
    %458 = vmatpush.msra.mxu0 0.0
    %459 = vmatpush.msra.mxu0 0.0
    %460 = vmatpush.msra.mxu0 0.0
    %461 = vmatpush.msra.mxu0 0.0
    %462 = vmatpush.msra.mxu0 0.0
    %463 = vmatpush.msra.mxu0 0.0
    %464 = vmatpush.msra.mxu0 0.0
    %465 = vmatpush.msra.mxu0 0.0
    %466 = vmatpush.msra.mxu0 0.0
    %467 = vmatpush.msra.mxu0 0.0
    %468 = vmatpush.msra.mxu0 %v151
    %469 = vmatpush.msra.mxu0 %v150
    %470 = vmatpush.msra.mxu0 %v149
    %471 = vmatpush.msra.mxu0 %v148
    %472 = vmatmul.f32.gmra.mxu0 %v454
    %v473 = vpop.f32.mrf.mxu0
    %v474 = vadd.f32 %v154, %v473
    %475 = vdwg.mxu0
    %v476 = vadd.f32 %v449, %v474
    %v477 = vxor.u32 %v476, 2147483648
    %v478 = vmul.f32 %v477, 1.442695
    %v479 = vpow.pop %v478
    %v480 = vadd.f32 %v479, 1.0
    %v481 = vrcp.pop %v480
    %v482 = vmul.f32 %v480, %v481
    %v483 = vsub.f32 1.0, %v482
    %v484 = vmul.f32 %v481, %v483
    %v485 = vadd.f32 %v481, %v484
    %vm486 = vweird.f32 %v480
    %vm487 = vweird.f32 %v481
    %vm488 = vmor %vm486, %vm487
    %v489 = vsel %vm488, %v481, %v485
    %v490 = vand.u32 2147483647, %v480
    %vm491 = vcmp.eq.f32.partialorder %v490, 8.507059e+37
    %v492 = vand.u32 %v480, 2147483648
    %v493 = vor.u32 1.1754944e-38, %v492
    %v494 = vsel %vm491, %v493, %v489
    %v495 = vmul.f32 1.0, %v494
    %497 = vrot.lane.b32.xlu0 %v474, 64
    %v498 = vpop.permute.xlu0 %497
    %v500 = vmul.f32 %v495, %v498
    %502 = vrot.lane.b32.xlu0 %v500, 64
    %v503 = vpop.permute.xlu0 %502
    %v505 = vadd.f32 %v449, %v503
    %v506 = vtanh.pop %v505
    %v507 = vsub.f32 1.0, %v495
    %509 = vrot.lane.b32.xlu0 %v506, 96
    %v510 = vpop.permute.xlu0 %509
    %v512 = vmul.f32 %v507, %v510
    %v514 = vmul.f32 %v495, %v451
    %v515 = vadd.f32 %v512, %v514
    %v516 = vrot.slane %v143, 2
    %v518 = vsel %vm170, %v146, %v516
    %520 = vrot.lane.b32.xlu0 %v515, 96
    %v521 = vpop.permute.xlu0 %520
    %v522 = vsel %vm118, %v521, 0
    %524 = vmatpush.msra.mxu0 0.0
    %525 = vmatpush.msra.mxu0 0.0
    %526 = vmatpush.msra.mxu0 0.0
    %527 = vmatpush.msra.mxu0 0.0
    %528 = vmatpush.msra.mxu0 0.0
    %529 = vmatpush.msra.mxu0 0.0
    %530 = vmatpush.msra.mxu0 0.0
    %531 = vmatpush.msra.mxu0 0.0
    %532 = vmatpush.msra.mxu0 0.0
    %533 = vmatpush.msra.mxu0 0.0
    %534 = vmatpush.msra.mxu0 0.0
    %535 = vmatpush.msra.mxu0 0.0
    %536 = vmatpush.msra.mxu0 %v151
    %537 = vmatpush.msra.mxu0 %v150
    %538 = vmatpush.msra.mxu0 %v149
    %539 = vmatpush.msra.mxu0 %v148
    %540 = vmatmul.f32.gmra.mxu0 %v522
    %v541 = vpop.f32.mrf.mxu0
    %v542 = vadd.f32 %v154, %v541
    %543 = vdwg.mxu0
    %v545 = vrot.slane %v542, 6
    %v547 = vadd.f32 %v518, %v545
    %v548 = vxor.u32 %v547, 2147483648
    %v549 = vmul.f32 %v548, 1.442695
    %v550 = vpow.pop %v549
    %v551 = vadd.f32 %v550, 1.0
    %v552 = vrcp.pop %v551
    %v553 = vmul.f32 %v551, %v552
    %v554 = vsub.f32 1.0, %v553
    %v555 = vmul.f32 %v552, %v554
    %v556 = vadd.f32 %v552, %v555
    %vm557 = vweird.f32 %v551
    %vm558 = vweird.f32 %v552
    %vm559 = vmor %vm557, %vm558
    %v560 = vsel %vm559, %v552, %v556
    %v561 = vand.u32 2147483647, %v551
    %vm562 = vcmp.eq.f32.partialorder %v561, 8.507059e+37
    %v563 = vand.u32 %v551, 2147483648
    %v564 = vor.u32 1.1754944e-38, %v563
    %v565 = vsel %vm562, %v564, %v560
    %v566 = vmul.f32 1.0, %v565
    %567 = vrot.lane.b32.xlu0 %v545, 64
    %v568 = vpop.permute.xlu0 %567
    %v570 = vmul.f32 %v566, %v568
    %572 = vrot.lane.b32.xlu0 %v570, 64
    %v573 = vpop.permute.xlu0 %572
    %v575 = vadd.f32 %v518, %v573
    %v576 = vtanh.pop %v575
    %v577 = vsub.f32 1.0, %v566
    %579 = vrot.lane.b32.xlu0 %v576, 96
    %v580 = vpop.permute.xlu0 %579
    %v582 = vmul.f32 %v577, %v580
    %v583 = vrot.slane %v515, 6
    %v585 = vmul.f32 %v566, %v583
    %v586 = vadd.f32 %v582, %v585
    %v588 = vrot.slane %v586, 2
    %589 = vrot.lane.b32.xlu0 %v588, 96
    %v590 = vpop.permute.xlu0 %589
    %v591 = vsel %vm118, %v590, 0
    %593 = vmatpush.msra.mxu0 0.0
    %594 = vmatpush.msra.mxu0 0.0
    %595 = vmatpush.msra.mxu0 0.0
    %596 = vmatpush.msra.mxu0 0.0
    %597 = vmatpush.msra.mxu0 0.0
    %598 = vmatpush.msra.mxu0 0.0
    %599 = vmatpush.msra.mxu0 0.0
    %600 = vmatpush.msra.mxu0 0.0
    %601 = vmatpush.msra.mxu0 0.0
    %602 = vmatpush.msra.mxu0 0.0
    %603 = vmatpush.msra.mxu0 0.0
    %604 = vmatpush.msra.mxu0 0.0
    %605 = vmatpush.msra.mxu0 %v151
    %606 = vmatpush.msra.mxu0 %v150
    %607 = vmatpush.msra.mxu0 %v149
    %608 = vmatpush.msra.mxu0 %v148
    %609 = vmatmul.f32.gmra.mxu0 %v591
    %v610 = vpop.f32.mrf.mxu0
    %v611 = vadd.f32 %v154, %v610
    %612 = vdwg.mxu0
    %v614 = vrot.slane %v611, 4
    %v616 = vadd.f32 %v449, %v614
    %v617 = vxor.u32 %v616, 2147483648
    %v618 = vmul.f32 %v617, 1.442695
    %v619 = vpow.pop %v618
    %v620 = vadd.f32 %v619, 1.0
    %v621 = vrcp.pop %v620
    %v622 = vmul.f32 %v620, %v621
    %v623 = vsub.f32 1.0, %v622
    %v624 = vmul.f32 %v621, %v623
    %v625 = vadd.f32 %v621, %v624
    %vm626 = vweird.f32 %v620
    %vm627 = vweird.f32 %v621
    %vm628 = vmor %vm626, %vm627
    %v629 = vsel %vm628, %v621, %v625
    %v630 = vand.u32 2147483647, %v620
    %vm631 = vcmp.eq.f32.partialorder %v630, 8.507059e+37
    %v632 = vand.u32 %v620, 2147483648
    %v633 = vor.u32 1.1754944e-38, %v632
    %v634 = vsel %vm631, %v633, %v629
    %v635 = vmul.f32 1.0, %v634
    %636 = vrot.lane.b32.xlu0 %v614, 64
    %v637 = vpop.permute.xlu0 %636
    %v639 = vmul.f32 %v635, %v637
    %641 = vrot.lane.b32.xlu0 %v639, 64
    %v642 = vpop.permute.xlu0 %641
    %v644 = vadd.f32 %v449, %v642
    %v645 = vtanh.pop %v644
    %v646 = vsub.f32 1.0, %v635
    %648 = vrot.lane.b32.xlu0 %v645, 96
    %v649 = vpop.permute.xlu0 %648
    %v651 = vmul.f32 %v646, %v649
    %v652 = vrot.slane %v586, 6
    %v654 = vmul.f32 %v635, %v652
    %v655 = vadd.f32 %v651, %v654
    %v657 = vrot.slane %v655, 4
    %658 = vrot.lane.b32.xlu0 %v657, 96
    %v659 = vpop.permute.xlu0 %658
    %v660 = vsel %vm118, %v659, 0
    %662 = vmatpush.msra.mxu0 0.0
    %663 = vmatpush.msra.mxu0 0.0
    %664 = vmatpush.msra.mxu0 0.0
    %665 = vmatpush.msra.mxu0 0.0
    %666 = vmatpush.msra.mxu0 0.0
    %667 = vmatpush.msra.mxu0 0.0
    %668 = vmatpush.msra.mxu0 0.0
    %669 = vmatpush.msra.mxu0 0.0
    %670 = vmatpush.msra.mxu0 0.0
    %671 = vmatpush.msra.mxu0 0.0
    %672 = vmatpush.msra.mxu0 0.0
    %673 = vmatpush.msra.mxu0 0.0
    %674 = vmatpush.msra.mxu0 %v151
    %675 = vmatpush.msra.mxu0 %v150
    %676 = vmatpush.msra.mxu0 %v149
    %677 = vmatpush.msra.mxu0 %v148
    %678 = vmatmul.f32.gmra.mxu0 %v660
    %v679 = vpop.f32.mrf.mxu0
    %v680 = vadd.f32 %v154, %v679
    %681 = vdwg.mxu0
    %v683 = vrot.slane %v680, 2
    %v685 = vadd.f32 %v518, %v683
    %v686 = vxor.u32 %v685, 2147483648
    %v687 = vmul.f32 %v686, 1.442695
    %v688 = vpow.pop %v687
    %v689 = vadd.f32 %v688, 1.0
    %v690 = vrcp.pop %v689
    %v691 = vmul.f32 %v689, %v690
    %v692 = vsub.f32 1.0, %v691
    %v693 = vmul.f32 %v690, %v692
    %v694 = vadd.f32 %v690, %v693
    %vm695 = vweird.f32 %v689
    %vm696 = vweird.f32 %v690
    %vm697 = vmor %vm695, %vm696
    %v698 = vsel %vm697, %v690, %v694
    %v699 = vand.u32 2147483647, %v689
    %vm700 = vcmp.eq.f32.partialorder %v699, 8.507059e+37
    %v701 = vand.u32 %v689, 2147483648
    %v702 = vor.u32 1.1754944e-38, %v701
    %v703 = vsel %vm700, %v702, %v698
    %v704 = vmul.f32 1.0, %v703
    %705 = vrot.lane.b32.xlu0 %v683, 64
    %v706 = vpop.permute.xlu0 %705
    %v708 = vmul.f32 %v704, %v706
    %710 = vrot.lane.b32.xlu0 %v708, 64
    %v711 = vpop.permute.xlu0 %710
    %v713 = vadd.f32 %v518, %v711
    %v714 = vtanh.pop %v713
    %v715 = vsub.f32 1.0, %v704
    %717 = vrot.lane.b32.xlu0 %v714, 96
    %v718 = vpop.permute.xlu0 %717
    %v720 = vmul.f32 %v715, %v718
    %v721 = vrot.slane %v655, 6
    %v723 = vmul.f32 %v704, %v721
    %v724 = vadd.f32 %v720, %v723
    %v725 = vld [vmem:[%s6] sm:$0xff]
    %v726 = vld [vmem:[%s6 + $0x8] sm:$0xff]
    %v727 = vld [vmem:[%s6 + $0x10] sm:$0xff]
    %v728 = vld [vmem:[%s6 + $0x18] sm:$0xff]
    %v729 = vld [vmem:[%s7] sm:$0x1]
    %v731 = vperm.slane %v729, 0
    %v734 = vrot.slane %v724, 6
    %735 = vrot.lane.b32.xlu0 %v734, 96
    %v736 = vpop.permute.xlu0 %735
    %v737 = vsel %vm118, %v736, 0
    %739 = vmatpush.msra.mxu0 0.0
    %740 = vmatpush.msra.mxu0 0.0
    %741 = vmatpush.msra.mxu0 0.0
    %742 = vmatpush.msra.mxu0 0.0
    %743 = vmatpush.msra.mxu0 0.0
    %744 = vmatpush.msra.mxu0 0.0
    %745 = vmatpush.msra.mxu0 0.0
    %746 = vmatpush.msra.mxu0 0.0
    %747 = vmatpush.msra.mxu0 0.0
    %748 = vmatpush.msra.mxu0 0.0
    %749 = vmatpush.msra.mxu0 0.0
    %750 = vmatpush.msra.mxu0 0.0
    %751 = vmatpush.msra.mxu0 %v728
    %752 = vmatpush.msra.mxu0 %v727
    %753 = vmatpush.msra.mxu0 %v726
    %754 = vmatpush.msra.mxu0 %v725
    %755 = vmatmul.f32.gmra.mxu0 %v737
    %v756 = vpop.f32.mrf.mxu0
    %v757 = vadd.f32 %v731, %v756
    %758 = vdwg.mxu0
    %vm759 = vcmask 25600
    %760 = vst.msk [vmem:[#allocation6] sm:$0x3] %vm759, %v757
    // Predicated region
    $region38: #{rnn_forward.1} parent=1 // pred_check
      _
    $region39: #{rnn_forward.1} parent=1 // pred_check_branch
      %762 = sbr.rel (0) target = $region41
    $region40: #{rnn_forward.1} parent=1 // pred_region
      %764 = vsyncadd [#allocation4], 0
      %s766 = sshll.u32 [#allocation6], 4
      %s767 = int_to_ptr.vmem [resolvable:$true] %s766
      %s768 = sshll.u32 %s8, 4
      %s769 = int_to_ptr.hbm [resolvable:$true] %s768
      %771 = dma.vmem_to_hbm [thread:$0]  %s767, 32, %s769, [#allocation4]
    $region41: #{rnn_forward.1} parent=1 // pred_fallthru
      _
    // Predicated region
    $region42: #{rnn_forward.1} parent=1 // pred_check
      _
    $region43: #{rnn_forward.1} parent=1 // pred_check_branch
      %773 = sbr.rel (0) target = $region45
    $region44: #{rnn_forward.1} parent=1 // pred_region
      %775 = dma.done [#allocation4], 32
    $region45: #{rnn_forward.1} parent=1 // pred_fallthru
      _
    %776 = vsyncpa [#allocation4], 1
    %777 = vsyncpa [#allocation5], 1

</llo_original>
